<compile_context>
chip_gen: v7x
topology: tpu7x:2x2x1
jax: 0.10.0
libtpu: 0.0.40
codegen_flags: <defaults>
</compile_context>

<pallas_src>
import jax
import jax.numpy as jnp
from jax.experimental import pallas as pl
from jax.experimental.pallas import tpu as pltpu

HIDDEN_DIM = 500
IMG_PIXELS = 28 * 28          # 784 (= 6*128 + 16; full-dim last block, fine)
HIDDEN_PAD = 512              # 500 -> 4 * 128 (lane aligned)
_SUBLANE = 16                 # bf16 sublane packing group


def _round_up(x, m):
    return (x + m - 1) // m * m


def _cdiv(a, b):
    return -(-a // b)


def _has_bf16_eltwise():
    """bf16 VPU/EUP path exists on v6e / v7x; keep f32 elementwise elsewhere."""
    try:
        kind = jax.devices()[0].device_kind.lower()
    except Exception:
        return False
    return ("v6" in kind) or ("v7" in kind) or ("7x" in kind)


def _make_kernel(bf16_eltwise):
    def decoder_mlp_kernel(z_ref, w1_ref, b1_ref, w2_ref, b2_ref, o_ref):
        # ---- Layer 1: Linear(latent, 500) + Tanh (hidden zero-padded to 512) ----
        z_bf16 = z_ref[...].astype(jnp.bfloat16)          # tiny (tb, latent) cast
        pre1 = (
            jnp.dot(z_bf16, w1_ref[...], preferred_element_type=jnp.float32)
            + b1_ref[...]
        )
        if bf16_eltwise:
            h = jnp.tanh(pre1.astype(jnp.bfloat16))       # bf16 EUP (v6e/v7x)
        else:
            h = jnp.tanh(pre1).astype(jnp.bfloat16)       # f32 EUP (v5e-safe)

        # ---- Layer 2: Linear(500, 784) + Sigmoid ----
        logits = (
            jnp.dot(h, w2_ref[...], preferred_element_type=jnp.float32)
            + b2_ref[...]
        )
        # sigmoid(x) == 0.5 * (tanh(0.5 * x) + 1): single EUP op per element.
        if bf16_eltwise:
            t = jnp.tanh((0.5 * logits).astype(jnp.bfloat16))
            o_ref[...] = (0.5 * (t + 1.0)).astype(o_ref.dtype)
        else:
            o_ref[...] = (0.5 * (jnp.tanh(0.5 * logits) + 1.0)).astype(o_ref.dtype)

    return decoder_mlp_kernel


def decoder_mlp_forward(z, w1, b1, w2, b2, *, block_b=1024,
                        out_dtype=jnp.bfloat16, bf16_eltwise=None):
    """z: (B, latent_dim) f32 -> (B, 1, 28, 28) in `out_dtype` (default bf16).

    w1: (latent, 512) bf16, b1: (1, 512) f32,
    w2: (512, 784) bf16,   b2: (1, 784) f32   (see init_params).
    """
    B, latent_dim = z.shape
    if bf16_eltwise is None:
        bf16_eltwise = _has_bf16_eltwise()

    # Batch tiling: balanced tiles to minimize padding; force >=2 (and an even
    # number of) grid steps when B is large enough so both v7x TensorCores get
    # work under dimension_semantics=("parallel",).
    num_tiles = max(1, _cdiv(B, block_b))
    if B >= 2 * _SUBLANE:
        num_tiles = max(num_tiles, 2)
    if num_tiles > 1 and num_tiles % 2 == 1:
        num_tiles += 1
    tb = _round_up(_cdiv(B, num_tiles), _SUBLANE)
    b_pad = tb * num_tiles

    z_p = z if b_pad == B else jnp.pad(z, ((0, b_pad - B), (0, 0)))

    weight_bytes = w1.size * 2 + w2.size * 2 + (b1.size + b2.size) * 4
    out_bytes = b_pad * IMG_PIXELS * jnp.dtype(out_dtype).itemsize
    cost = pl.CostEstimate(
        flops=2 * b_pad * (latent_dim * HIDDEN_PAD + HIDDEN_PAD * IMG_PIXELS),
        transcendentals=b_pad * (HIDDEN_PAD + IMG_PIXELS),
        bytes_accessed=weight_bytes + b_pad * latent_dim * 4 + out_bytes,
    )

    out_flat = pl.pallas_call(
        _make_kernel(bf16_eltwise),
        out_shape=jax.ShapeDtypeStruct((b_pad, IMG_PIXELS), out_dtype),
        grid_spec=pltpu.PrefetchScalarGridSpec(
            num_scalar_prefetch=0,
            grid=(num_tiles,),
            in_specs=[
                pl.BlockSpec((tb, latent_dim), lambda i: (i, 0)),            # z tile
                pl.BlockSpec((latent_dim, HIDDEN_PAD), lambda i: (0, 0)),    # W1 resident
                pl.BlockSpec((1, HIDDEN_PAD), lambda i: (0, 0)),             # b1 resident
                pl.BlockSpec((HIDDEN_PAD, IMG_PIXELS), lambda i: (0, 0)),    # W2 resident
                pl.BlockSpec((1, IMG_PIXELS), lambda i: (0, 0)),             # b2 resident
            ],
            out_specs=pl.BlockSpec((tb, IMG_PIXELS), lambda i: (i, 0)),
        ),
        compiler_params=pltpu.CompilerParams(
            dimension_semantics=("parallel",),    # shard batch tiles across TCs
            vmem_limit_bytes=48 * 1024 * 1024,    # ~25% headroom under v7x's 64 MiB
        ),
        cost_estimate=cost,
    )(z_p, w1, b1, w2, b2)

    # Strip batch padding only if any was added; reshape to PyTorch NCHW view
    # (free metadata reshape when b_pad == B).
    out = out_flat if b_pad == B else out_flat[:B]
    return out.reshape(B, 1, 28, 28)


def init_params(latent_dim, key):
    """Deterministic synthetic parameters (PyTorch Linear init), stored transposed.
    Hidden dim zero-padded 500->512 (lane aligned); weights bf16, biases f32.
    Output dim stays exactly 784 (no column padding to strip later)."""
    k1, k2, k3, k4 = jax.random.split(key, 4)
    lim1 = 1.0 / jnp.sqrt(latent_dim)
    w1 = jax.random.uniform(k1, (latent_dim, HIDDEN_DIM), jnp.float32, -lim1, lim1)
    b1 = jax.random.uniform(k2, (1, HIDDEN_DIM), jnp.float32, -lim1, lim1)
    lim2 = 1.0 / jnp.sqrt(HIDDEN_DIM)
    w2 = jax.random.uniform(k3, (HIDDEN_DIM, IMG_PIXELS), jnp.float32, -lim2, lim2)
    b2 = jax.random.uniform(k4, (1, IMG_PIXELS), jnp.float32, -lim2, lim2)

    # Zero-padding of the hidden dim keeps padded hidden columns at tanh(0)=0
    # and the padded W2 rows at 0, so padding never leaks into the 784 outputs.
    w1p = jnp.pad(w1, ((0, 0), (0, HIDDEN_PAD - HIDDEN_DIM))).astype(jnp.bfloat16)
    b1p = jnp.pad(b1, ((0, 0), (0, HIDDEN_PAD - HIDDEN_DIM)))
    w2p = jnp.pad(w2, ((0, HIDDEN_PAD - HIDDEN_DIM), (0, 0))).astype(jnp.bfloat16)
    return w1p, b1p, w2p, b2


if __name__ == "__main__":
    latent_dim = 8
    B = 2
    key = jax.random.PRNGKey(0)
    kz, kp = jax.random.split(key)

    z = jax.random.normal(kz, (B, latent_dim), jnp.float32)
    w1, b1, w2, b2 = init_params(latent_dim, kp)

    x_r = decoder_mlp_forward(z, w1, b1, w2, b2)
    x_r = jax.block_until_ready(x_r)

    # Reference in plain JAX (same bf16-stored weights, f32 compute).
    zb = z.astype(jnp.bfloat16).astype(jnp.float32)
    h_ref = jnp.tanh(zb @ w1.astype(jnp.float32) + b1)
    out_ref = jax.nn.sigmoid(h_ref @ w2.astype(jnp.float32) + b2)
    out_ref = out_ref.reshape(B, 1, 28, 28)

    assert x_r.shape == (B, 1, 28, 28)
    err = float(jnp.max(jnp.abs(x_r.astype(jnp.float32) - out_ref)))
    assert err < 2e-2, err
    print("KERNEL_OK")
</pallas_src>

<mosaic_0001>
module attributes {stable_mosaic.version = 11 : i64} {
  func.func @decoder_mlp_kernel(%arg0: i32, %arg1: memref<16x8xf32, #tpu.memory_space<vmem>>, %arg2: memref<8x512xbf16, #tpu.memory_space<vmem>>, %arg3: memref<1x512xf32, #tpu.memory_space<vmem>>, %arg4: memref<512x784xbf16, #tpu.memory_space<vmem>>, %arg5: memref<1x784xf32, #tpu.memory_space<vmem>>, %arg6: memref<16x784xbf16, #tpu.memory_space<vmem>>) attributes {dimension_semantics = [#tpu.dimension_semantics<parallel>], iteration_bounds = array<i64: 1>, scalar_prefetch = 0 : i64, scratch_operands = 0 : i64, tpu.core_type = #tpu.core_type<tc>, window_params = [{transform_indices = @transform_0, window_bounds = array<i64: 16, 8>}, {pipeline_mode = #tpu.pipeline_mode<synchronous>, transform_indices = @transform_1, window_bounds = array<i64: 8, 512>}, {pipeline_mode = #tpu.pipeline_mode<synchronous>, transform_indices = @transform_2, window_bounds = array<i64: 1, 512>}, {pipeline_mode = #tpu.pipeline_mode<synchronous>, transform_indices = @transform_3, window_bounds = array<i64: 512, 784>}, {pipeline_mode = #tpu.pipeline_mode<synchronous>, transform_indices = @transform_4, window_bounds = array<i64: 1, 784>}, {transform_indices = @transform_5, window_bounds = array<i64: 16, 784>}]} {
    %c0 = arith.constant 0 : index
    %c0_0 = arith.constant 0 : index
    %0 = vector.load %arg1[%c0, %c0_0] : memref<16x8xf32, #tpu.memory_space<vmem>>, vector<16x8xf32>
    %1 = arith.truncf %0 : vector<16x8xf32> to vector<16x8xbf16>
    %c0_1 = arith.constant 0 : index
    %c0_2 = arith.constant 0 : index
    %2 = vector.load %arg2[%c0_1, %c0_2] : memref<8x512xbf16, #tpu.memory_space<vmem>>, vector<8x512xbf16>
    %cst = arith.constant dense<0.000000e+00> : vector<16x512xf32>
    %3 = tpu.matmul %1, %2, %cst {dimension_numbers = #tpu.dot_dimension_numbers<[1], [0], [0], [1], [0, 0, 1, 1], [], []>} : vector<16x8xbf16>, vector<8x512xbf16>, vector<16x512xf32> -> vector<16x512xf32>
    %c0_3 = arith.constant 0 : index
    %c0_4 = arith.constant 0 : index
    %4 = vector.load %arg3[%c0_3, %c0_4] : memref<1x512xf32, #tpu.memory_space<vmem>>, vector<1x512xf32>
    %5 = vector.broadcast %4 : vector<1x512xf32> to vector<16x512xf32>
    %6 = arith.addf %3, %5 : vector<16x512xf32>
    %7 = math.tanh %6 : vector<16x512xf32>
    %8 = arith.truncf %7 : vector<16x512xf32> to vector<16x512xbf16>
    %c0_5 = arith.constant 0 : index
    %c0_6 = arith.constant 0 : index
    %9 = vector.load %arg4[%c0_5, %c0_6] : memref<512x784xbf16, #tpu.memory_space<vmem>>, vector<512x784xbf16>
    %cst_7 = arith.constant dense<0.000000e+00> : vector<16x784xf32>
    %10 = tpu.matmul %8, %9, %cst_7 {dimension_numbers = #tpu.dot_dimension_numbers<[1], [0], [0], [1], [0, 0, 1, 1], [], []>} : vector<16x512xbf16>, vector<512x784xbf16>, vector<16x784xf32> -> vector<16x784xf32>
    %c0_8 = arith.constant 0 : index
    %c0_9 = arith.constant 0 : index
    %11 = vector.load %arg5[%c0_8, %c0_9] : memref<1x784xf32, #tpu.memory_space<vmem>>, vector<1x784xf32>
    %12 = vector.broadcast %11 : vector<1x784xf32> to vector<16x784xf32>
    %13 = arith.addf %10, %12 : vector<16x784xf32>
    %cst_10 = arith.constant 5.000000e-01 : f32
    %14 = vector.broadcast %cst_10 : f32 to vector<16x784xf32>
    %15 = arith.mulf %14, %13 : vector<16x784xf32>
    %16 = math.tanh %15 : vector<16x784xf32>
    %cst_11 = arith.constant 1.000000e+00 : f32
    %17 = vector.broadcast %cst_11 : f32 to vector<16x784xf32>
    %18 = arith.addf %16, %17 : vector<16x784xf32>
    %cst_12 = arith.constant 5.000000e-01 : f32
    %19 = vector.broadcast %cst_12 : f32 to vector<16x784xf32>
    %20 = arith.mulf %19, %18 : vector<16x784xf32>
    %21 = arith.truncf %20 : vector<16x784xf32> to vector<16x784xbf16>
    %c0_13 = arith.constant 0 : index
    %c0_14 = arith.constant 0 : index
    %22 = vector.load %arg6[%c0_13, %c0_14] : memref<16x784xbf16, #tpu.memory_space<vmem>>, vector<16x784xbf16>
    tpu.vector_store %arg6[%c0_13, %c0_14], %21 {strides = array<i32>} : memref<16x784xbf16, #tpu.memory_space<vmem>>, vector<16x784xbf16>,
    return
  }
  func.func @transform_0(%arg0: i32) -> (i32, i32) {
    %c0_i32 = arith.constant 0 : i32
    %c0_i32_0 = arith.constant 0 : i32
    return %arg0, %c0_i32 : i32, i32
  }
  func.func @transform_1(%arg0: i32) -> (i32, i32) {
    %c0_i32 = arith.constant 0 : i32
    %c0_i32_0 = arith.constant 0 : i32
    %c0_i32_1 = arith.constant 0 : i32
    return %c0_i32, %c0_i32_0 : i32, i32
  }
  func.func @transform_2(%arg0: i32) -> (i32, i32) {
    %c0_i32 = arith.constant 0 : i32
    %c0_i32_0 = arith.constant 0 : i32
    %c0_i32_1 = arith.constant 0 : i32
    return %c0_i32, %c0_i32_0 : i32, i32
  }
  func.func @transform_3(%arg0: i32) -> (i32, i32) {
    %c0_i32 = arith.constant 0 : i32
    %c0_i32_0 = arith.constant 0 : i32
    %c0_i32_1 = arith.constant 0 : i32
    return %c0_i32, %c0_i32_0 : i32, i32
  }
  func.func @transform_4(%arg0: i32) -> (i32, i32) {
    %c0_i32 = arith.constant 0 : i32
    %c0_i32_0 = arith.constant 0 : i32
    %c0_i32_1 = arith.constant 0 : i32
    return %c0_i32, %c0_i32_0 : i32, i32
  }
  func.func @transform_5(%arg0: i32) -> (i32, i32) {
    %c0_i32 = arith.constant 0 : i32
    %c0_i32_0 = arith.constant 0 : i32
    return %arg0, %c0_i32 : i32, i32
  }
}

</mosaic_0001>

<llo_original>
// kernel: tpu_custom_call.1
$region0: #{tpu_custom_call.1}
  #allocation0 [shape = 'u32[]', space=smem, size = 0x4, offset = 0x4, fixed_abs, tag = 'smem constant byte address 0x4 - core index']
  #allocation1 [shape = 'u32[144,128]{1,0:T(1,128)}', space=vmem, size = 0x12000, scoped, tag = 'internal scratch']
  %s0 = inlined_call_operand.vmem [shape: f32[16,8], index: 0, kind: input, shape index: {}]
  %s1 = inlined_call_operand.vmem [shape: bf16[8,512], index: 1, kind: input, shape index: {}]
  %s2 = inlined_call_operand.vmem [shape: f32[1,512], index: 2, kind: input, shape index: {}]
  %s3 = inlined_call_operand.vmem [shape: bf16[512,784], index: 3, kind: input, shape index: {}]
  %s4 = inlined_call_operand.vmem [shape: f32[1,784], index: 4, kind: input, shape index: {}]
  %s5 = inlined_call_operand.hbm [shape: bf16[16,784], index: 5, kind: output, shape index: {}]
  %s6 = sld [smem:[#allocation0]]
  $region30: #{tpu_custom_call.1} parent=0
    _
  %s8 = ssub.s32 1, %s6
  %s9 = scalar_select 0, %s8, %s6
  $region1: #{tpu_custom_call.1} parent=0
    #allocation2 [shape = 'u8[28672]{0}', space=vmem, size = 0x7000, scoped, tag = 'output window, operand 0, single buffered']
    #allocation3 [shape = 's32[1]{0}', space=sflag, size = 0x4, scoped, tag = 'scoped memory for tpu_custom_call.1']
    %10 = vsyncpa [#allocation3], 0
    // Predicated region
    $region2: #{tpu_custom_call.1} parent=1 // pred_check
      _
    $region3: #{tpu_custom_call.1} parent=1 // pred_check_branch
      %12 = sbr.rel (0) target = $region5
    $region4: #{tpu_custom_call.1} parent=1 // pred_region
      _
    $region5: #{tpu_custom_call.1} parent=1 // pred_fallthru
      _
    // Predicated region
    $region6: #{tpu_custom_call.1} parent=1 // pred_check
      _
    $region7: #{tpu_custom_call.1} parent=1 // pred_check_branch
      %14 = sbr.rel (0) target = $region9
    $region8: #{tpu_custom_call.1} parent=1 // pred_region
      _
    $region9: #{tpu_custom_call.1} parent=1 // pred_fallthru
      _
    // Predicated region
    $region10: #{tpu_custom_call.1} parent=1 // pred_check
      _
    $region11: #{tpu_custom_call.1} parent=1 // pred_check_branch
      %16 = sbr.rel (0) target = $region13
    $region12: #{tpu_custom_call.1} parent=1 // pred_region
      _
    $region13: #{tpu_custom_call.1} parent=1 // pred_fallthru
      _
    // Predicated region
    $region14: #{tpu_custom_call.1} parent=1 // pred_check
      _
    $region15: #{tpu_custom_call.1} parent=1 // pred_check_branch
      %18 = sbr.rel (0) target = $region17
    $region16: #{tpu_custom_call.1} parent=1 // pred_region
      _
    $region17: #{tpu_custom_call.1} parent=1 // pred_fallthru
      _
    // Predicated region
    $region18: #{tpu_custom_call.1} parent=1 // pred_check
      _
    $region19: #{tpu_custom_call.1} parent=1 // pred_check_branch
      %20 = sbr.rel (0) target = $region21
    $region20: #{tpu_custom_call.1} parent=1 // pred_region
      _
    $region21: #{tpu_custom_call.1} parent=1 // pred_fallthru
      _
    %v22 = vld [vmem:[%s0] sm:$0xff]
    %v23 = vld [vmem:[%s0 + $0x8] sm:$0xff]
    %v24 = vpack.c.bf16 %v23, %v22
    %v25 = vld [vmem:[%s1] sm:$0xff]
    %v26 = vld [vmem:[%s1 + $0x8] sm:$0xff]
    %v27 = vld [vmem:[%s2] sm:$0xf]
    %v29 = vlaneseq
    %v30 = vshrl.u32 %v29, 7
    %v31 = vsub.s32 0, %v30
    %v32 = vrot.slane %v27, %v31
    %v33 = vlaneseq
    %v34 = vshrl.u32 %v33, 7
    %v35 = vsub.s32 1, %v34
    %v36 = vrot.slane %v27, %v35
    %v37 = vlaneseq
    %v38 = vshrl.u32 %v37, 7
    %v39 = vsub.s32 2, %v38
    %v40 = vrot.slane %v27, %v39
    %v41 = vlaneseq
    %v42 = vshrl.u32 %v41, 7
    %v43 = vsub.s32 3, %v42
    %v44 = vrot.slane %v27, %v43
    %v51 = vunpack.c.l.b16 %v25
    %v52 = vunpack.c.h.b16 %v25
    %v53 = vunpack.c.l.b16 %v26
    %v54 = vunpack.c.h.b16 %v26
    %v55 = vpack.c.b16 %v51, %v51
    %v56 = vpack.c.b16 %v52, %v52
    %v57 = vpack.c.b16 %v53, %v53
    %v58 = vpack.c.b16 %v54, %v54
    %vm59 = vcmask 64512
    %v61 = vsel %vm59, %v24, 0
    %vm63 = vcmask 1043456
    %v65 = vsel %vm63, %v55, 0
    %v68 = vsel %vm63, %v56, 0
    %v71 = vsel %vm63, %v57, 0
    %v74 = vsel %vm63, %v58, 0
    %76 = vmatprep.subr.bf16.mxu0 %v68
    %77 = vmatpush1.bf16.msra.mxu0 %v65
    %78 = vmatprep.subr.bf16.mxu0 0
    %79 = vmatpush1.bf16.msra.mxu0 0
    %80 = vmatprep.subr.bf16.mxu0 0
    %81 = vmatpush1.bf16.msra.mxu0 0
    %82 = vmatprep.subr.bf16.mxu0 0
    %83 = vmatpush1.bf16.msra.mxu0 0
    %84 = vmatprep.subr.bf16.mxu0 0
    %85 = vmatpush1.bf16.msra.mxu0 0
    %86 = vmatprep.subr.bf16.mxu0 0
    %87 = vmatpush1.bf16.msra.mxu0 0
    %88 = vmatprep.subr.bf16.mxu0 0
    %89 = vmatpush1.bf16.msra.mxu0 0
    %90 = vmatprep.subr.bf16.mxu0 0
    %91 = vmatpush1.bf16.msra.mxu0 0
    %92 = vmatprep.subr.bf16.mxu0 0
    %93 = vmatpush1.bf16.msra.mxu0 0
    %94 = vmatprep.subr.bf16.mxu0 0
    %95 = vmatpush1.bf16.msra.mxu0 0
    %96 = vmatprep.subr.bf16.mxu0 0
    %97 = vmatpush1.bf16.msra.mxu0 0
    %98 = vmatprep.subr.bf16.mxu0 0
    %99 = vmatpush1.bf16.msra.mxu0 0
    %100 = vmatprep.subr.bf16.mxu0 0
    %101 = vmatpush1.bf16.msra.mxu0 0
    %102 = vmatprep.subr.bf16.mxu0 0
    %103 = vmatpush1.bf16.msra.mxu0 0
    %104 = vmatprep.subr.bf16.mxu0 0
    %105 = vmatpush1.bf16.msra.mxu0 0
    %106 = vmatprep.subr.bf16.mxu0 0
    %107 = vmatpush1.bf16.msra.mxu0 0
    %108 = vmatprep.mubr.bf16.mxu0 0
    %109 = vmatmul.mubr.bf16.gmra.mrb[0].mxu0 %v61
    %v110 = vpop.f32.mrb[0].mxu0
    %v111 = vadd.f32 %v32, %v110
    %v112 = vpop.f32.mrb[0].mxu0
    %v113 = vadd.f32 %v36, %v112
    %v114 = vpop.f32.mrb[0].mxu0
    %v115 = vadd.f32 %v32, %v114
    %v116 = vpop.f32.mrb[0].mxu0
    %v117 = vadd.f32 %v36, %v116
    %118 = vdwg.mxu0
    %119 = vmatprep.subr.bf16.mxu0 %v74
    %120 = vmatpush1.bf16.msra.mxu0 %v71
    %121 = vmatprep.subr.bf16.mxu0 0
    %122 = vmatpush1.bf16.msra.mxu0 0
    %123 = vmatprep.subr.bf16.mxu0 0
    %124 = vmatpush1.bf16.msra.mxu0 0
    %125 = vmatprep.subr.bf16.mxu0 0
    %126 = vmatpush1.bf16.msra.mxu0 0
    %127 = vmatprep.subr.bf16.mxu0 0
    %128 = vmatpush1.bf16.msra.mxu0 0
    %129 = vmatprep.subr.bf16.mxu0 0
    %130 = vmatpush1.bf16.msra.mxu0 0
    %131 = vmatprep.subr.bf16.mxu0 0
    %132 = vmatpush1.bf16.msra.mxu0 0
    %133 = vmatprep.subr.bf16.mxu0 0
    %134 = vmatpush1.bf16.msra.mxu0 0
    %135 = vmatprep.subr.bf16.mxu0 0
    %136 = vmatpush1.bf16.msra.mxu0 0
    %137 = vmatprep.subr.bf16.mxu0 0
    %138 = vmatpush1.bf16.msra.mxu0 0
    %139 = vmatprep.subr.bf16.mxu0 0
    %140 = vmatpush1.bf16.msra.mxu0 0
    %141 = vmatprep.subr.bf16.mxu0 0
    %142 = vmatpush1.bf16.msra.mxu0 0
    %143 = vmatprep.subr.bf16.mxu0 0
    %144 = vmatpush1.bf16.msra.mxu0 0
    %145 = vmatprep.subr.bf16.mxu0 0
    %146 = vmatpush1.bf16.msra.mxu0 0
    %147 = vmatprep.subr.bf16.mxu0 0
    %148 = vmatpush1.bf16.msra.mxu0 0
    %149 = vmatprep.subr.bf16.mxu0 0
    %150 = vmatpush1.bf16.msra.mxu0 0
    %151 = vmatprep.mubr.bf16.mxu0 0
    %152 = vmatmul.mubr.bf16.gmra.mrb[0].mxu0 %v61
    %v153 = vpop.f32.mrb[0].mxu0
    %v154 = vadd.f32 %v40, %v153
    %v155 = vpop.f32.mrb[0].mxu0
    %v156 = vadd.f32 %v44, %v155
    %v157 = vpop.f32.mrb[0].mxu0
    %v158 = vadd.f32 %v40, %v157
    %v159 = vpop.f32.mrb[0].mxu0
    %v160 = vadd.f32 %v44, %v159
    %161 = vdwg.mxu0
    %v162 = vtanh.pop %v111
    %v163 = vtanh.pop %v113
    %v164 = vtanh.pop %v154
    %v165 = vtanh.pop %v156
    %v166 = vtanh.pop %v115
    %v167 = vtanh.pop %v117
    %v168 = vtanh.pop %v158
    %v169 = vtanh.pop %v160
    %v170 = vpack.c.bf16 %v166, %v162
    %v171 = vpack.c.bf16 %v167, %v163
    %v172 = vpack.c.bf16 %v168, %v164
    %v173 = vpack.c.bf16 %v169, %v165
    %v174 = vld [vmem:[%s3] sm:$0xff]
    %v175 = vld [vmem:[%s3 + $0x8] sm:$0xff]
    %v176 = vld [vmem:[%s3 + $0x10] sm:$0xff]
    %v177 = vld [vmem:[%s3 + $0x18] sm:$0xf]
    %v178 = vld [vmem:[%s3 + $0x1c] sm:$0xff]
    %v179 = vld [vmem:[%s3 + $0x24] sm:$0xff]
    %v180 = vld [vmem:[%s3 + $0x2c] sm:$0xff]
    %v181 = vld [vmem:[%s3 + $0x34] sm:$0xf]
    %v182 = vld [vmem:[%s3 + $0x38] sm:$0xff]
    %v183 = vld [vmem:[%s3 + $0x40] sm:$0xff]
    %v184 = vld [vmem:[%s3 + $0x48] sm:$0xff]
    %v185 = vld [vmem:[%s3 + $0x50] sm:$0xf]
    %v186 = vld [vmem:[%s3 + $0x54] sm:$0xff]
    %v187 = vld [vmem:[%s3 + $0x5c] sm:$0xff]
    %v188 = vld [vmem:[%s3 + $0x64] sm:$0xff]
    %v189 = vld [vmem:[%s3 + $0x6c] sm:$0xf]
    %v190 = vld [vmem:[%s3 + $0x70] sm:$0xff]
    %v191 = vld [vmem:[%s3 + $0x78] sm:$0xff]
    %v192 = vld [vmem:[%s3 + $0x80] sm:$0xff]
    %v193 = vld [vmem:[%s3 + $0x88] sm:$0xf]
    %v194 = vld [vmem:[%s3 + $0x8c] sm:$0xff]
    %v195 = vld [vmem:[%s3 + $0x94] sm:$0xff]
    %v196 = vld [vmem:[%s3 + $0x9c] sm:$0xff]
    %v197 = vld [vmem:[%s3 + $0xa4] sm:$0xf]
    %v198 = vld [vmem:[%s3 + $0xa8] sm:$0xff]
    %v199 = vld [vmem:[%s3 + $0xb0] sm:$0xff]
    %v200 = vld [vmem:[%s3 + $0xb8] sm:$0xff]
    %v201 = vld [vmem:[%s3 + $0xc0] sm:$0xf]
    %v202 = vld [vmem:[%s3 + $0xc4] sm:$0xff]
    %v203 = vld [vmem:[%s3 + $0xcc] sm:$0xff]
    %v204 = vld [vmem:[%s3 + $0xd4] sm:$0xff]
    %v205 = vld [vmem:[%s3 + $0xdc] sm:$0xf]
    %v206 = vld [vmem:[%s3 + $0xe0] sm:$0xff]
    %v207 = vld [vmem:[%s3 + $0xe8] sm:$0xff]
    %v208 = vld [vmem:[%s3 + $0xf0] sm:$0xff]
    %v209 = vld [vmem:[%s3 + $0xf8] sm:$0xf]
    %v210 = vld [vmem:[%s3 + $0xfc] sm:$0xff]
    %v211 = vld [vmem:[%s3 + $0x104] sm:$0xff]
    %v212 = vld [vmem:[%s3 + $0x10c] sm:$0xff]
    %v213 = vld [vmem:[%s3 + $0x114] sm:$0xf]
    %v214 = vld [vmem:[%s3 + $0x118] sm:$0xff]
    %v215 = vld [vmem:[%s3 + $0x120] sm:$0xff]
    %v216 = vld [vmem:[%s3 + $0x128] sm:$0xff]
    %v217 = vld [vmem:[%s3 + $0x130] sm:$0xf]
    %v218 = vld [vmem:[%s3 + $0x134] sm:$0xff]
    %v219 = vld [vmem:[%s3 + $0x13c] sm:$0xff]
    %v220 = vld [vmem:[%s3 + $0x144] sm:$0xff]
    %v221 = vld [vmem:[%s3 + $0x14c] sm:$0xf]
    %v222 = vld [vmem:[%s3 + $0x150] sm:$0xff]
    %v223 = vld [vmem:[%s3 + $0x158] sm:$0xff]
    %v224 = vld [vmem:[%s3 + $0x160] sm:$0xff]
    %v225 = vld [vmem:[%s3 + $0x168] sm:$0xf]
    %v226 = vld [vmem:[%s3 + $0x16c] sm:$0xff]
    %v227 = vld [vmem:[%s3 + $0x174] sm:$0xff]
    %v228 = vld [vmem:[%s3 + $0x17c] sm:$0xff]
    %v229 = vld [vmem:[%s3 + $0x184] sm:$0xf]
    %v230 = vld [vmem:[%s3 + $0x188] sm:$0xff]
    %v231 = vld [vmem:[%s3 + $0x190] sm:$0xff]
    %v232 = vld [vmem:[%s3 + $0x198] sm:$0xff]
    %v233 = vld [vmem:[%s3 + $0x1a0] sm:$0xf]
    %v234 = vld [vmem:[%s3 + $0x1a4] sm:$0xff]
    %v235 = vld [vmem:[%s3 + $0x1ac] sm:$0xff]
    %v236 = vld [vmem:[%s3 + $0x1b4] sm:$0xff]
    %v237 = vld [vmem:[%s3 + $0x1bc] sm:$0xf]
    %v238 = vld [vmem:[%s3 + $0x1c0] sm:$0xff]
    %v239 = vld [vmem:[%s3 + $0x1c8] sm:$0xff]
    %v240 = vld [vmem:[%s3 + $0x1d0] sm:$0xff]
    %v241 = vld [vmem:[%s3 + $0x1d8] sm:$0xf]
    %v242 = vld [vmem:[%s3 + $0x1dc] sm:$0xff]
    %v243 = vld [vmem:[%s3 + $0x1e4] sm:$0xff]
    %v244 = vld [vmem:[%s3 + $0x1ec] sm:$0xff]
    %v245 = vld [vmem:[%s3 + $0x1f4] sm:$0xf]
    %v246 = vld [vmem:[%s3 + $0x1f8] sm:$0xff]
    %v247 = vld [vmem:[%s3 + $0x200] sm:$0xff]
    %v248 = vld [vmem:[%s3 + $0x208] sm:$0xff]
    %v249 = vld [vmem:[%s3 + $0x210] sm:$0xf]
    %v250 = vld [vmem:[%s3 + $0x214] sm:$0xff]
    %v251 = vld [vmem:[%s3 + $0x21c] sm:$0xff]
    %v252 = vld [vmem:[%s3 + $0x224] sm:$0xff]
    %v253 = vld [vmem:[%s3 + $0x22c] sm:$0xf]
    %v254 = vld [vmem:[%s3 + $0x230] sm:$0xff]
    %v255 = vld [vmem:[%s3 + $0x238] sm:$0xff]
    %v256 = vld [vmem:[%s3 + $0x240] sm:$0xff]
    %v257 = vld [vmem:[%s3 + $0x248] sm:$0xf]
    %v258 = vld [vmem:[%s3 + $0x24c] sm:$0xff]
    %v259 = vld [vmem:[%s3 + $0x254] sm:$0xff]
    %v260 = vld [vmem:[%s3 + $0x25c] sm:$0xff]
    %v261 = vld [vmem:[%s3 + $0x264] sm:$0xf]
    %v262 = vld [vmem:[%s3 + $0x268] sm:$0xff]
    %v263 = vld [vmem:[%s3 + $0x270] sm:$0xff]
    %v264 = vld [vmem:[%s3 + $0x278] sm:$0xff]
    %v265 = vld [vmem:[%s3 + $0x280] sm:$0xf]
    %v266 = vld [vmem:[%s3 + $0x284] sm:$0xff]
    %v267 = vld [vmem:[%s3 + $0x28c] sm:$0xff]
    %v268 = vld [vmem:[%s3 + $0x294] sm:$0xff]
    %v269 = vld [vmem:[%s3 + $0x29c] sm:$0xf]
    %v270 = vld [vmem:[%s3 + $0x2a0] sm:$0xff]
    %v271 = vld [vmem:[%s3 + $0x2a8] sm:$0xff]
    %v272 = vld [vmem:[%s3 + $0x2b0] sm:$0xff]
    %v273 = vld [vmem:[%s3 + $0x2b8] sm:$0xf]
    %v274 = vld [vmem:[%s3 + $0x2bc] sm:$0xff]
    %v275 = vld [vmem:[%s3 + $0x2c4] sm:$0xff]
    %v276 = vld [vmem:[%s3 + $0x2cc] sm:$0xff]
    %v277 = vld [vmem:[%s3 + $0x2d4] sm:$0xf]
    %v278 = vld [vmem:[%s3 + $0x2d8] sm:$0xff]
    %v279 = vld [vmem:[%s3 + $0x2e0] sm:$0xff]
    %v280 = vld [vmem:[%s3 + $0x2e8] sm:$0xff]
    %v281 = vld [vmem:[%s3 + $0x2f0] sm:$0xf]
    %v282 = vld [vmem:[%s3 + $0x2f4] sm:$0xff]
    %v283 = vld [vmem:[%s3 + $0x2fc] sm:$0xff]
    %v284 = vld [vmem:[%s3 + $0x304] sm:$0xff]
    %v285 = vld [vmem:[%s3 + $0x30c] sm:$0xf]
    %v286 = vld [vmem:[%s3 + $0x310] sm:$0xff]
    %v287 = vld [vmem:[%s3 + $0x318] sm:$0xff]
    %v288 = vld [vmem:[%s3 + $0x320] sm:$0xff]
    %v289 = vld [vmem:[%s3 + $0x328] sm:$0xf]
    %v290 = vld [vmem:[%s3 + $0x32c] sm:$0xff]
    %v291 = vld [vmem:[%s3 + $0x334] sm:$0xff]
    %v292 = vld [vmem:[%s3 + $0x33c] sm:$0xff]
    %v293 = vld [vmem:[%s3 + $0x344] sm:$0xf]
    %v294 = vld [vmem:[%s3 + $0x348] sm:$0xff]
    %v295 = vld [vmem:[%s3 + $0x350] sm:$0xff]
    %v296 = vld [vmem:[%s3 + $0x358] sm:$0xff]
    %v297 = vld [vmem:[%s3 + $0x360] sm:$0xf]
    %v298 = vld [vmem:[%s3 + $0x364] sm:$0xff]
    %v299 = vld [vmem:[%s3 + $0x36c] sm:$0xff]
    %v300 = vld [vmem:[%s3 + $0x374] sm:$0xff]
    %v301 = vld [vmem:[%s3 + $0x37c] sm:$0xf]
    %v302 = vld [vmem:[%s3 + $0x380] sm:$0xff]
    %v303 = vld [vmem:[%s3 + $0x388] sm:$0xff]
    %v304 = vld [vmem:[%s3 + $0x390] sm:$0xff]
    %v305 = vld [vmem:[%s3 + $0x398] sm:$0xf]
    %v306 = vld [vmem:[%s3 + $0x39c] sm:$0xff]
    %v307 = vld [vmem:[%s3 + $0x3a4] sm:$0xff]
    %v308 = vld [vmem:[%s3 + $0x3ac] sm:$0xff]
    %v309 = vld [vmem:[%s3 + $0x3b4] sm:$0xf]
    %v310 = vld [vmem:[%s3 + $0x3b8] sm:$0xff]
    %v311 = vld [vmem:[%s3 + $0x3c0] sm:$0xff]
    %v312 = vld [vmem:[%s3 + $0x3c8] sm:$0xff]
    %v313 = vld [vmem:[%s3 + $0x3d0] sm:$0xf]
    %v314 = vld [vmem:[%s3 + $0x3d4] sm:$0xff]
    %v315 = vld [vmem:[%s3 + $0x3dc] sm:$0xff]
    %v316 = vld [vmem:[%s3 + $0x3e4] sm:$0xff]
    %v317 = vld [vmem:[%s3 + $0x3ec] sm:$0xf]
    %v318 = vld [vmem:[%s3 + $0x3f0] sm:$0xff]
    %v319 = vld [vmem:[%s3 + $0x3f8] sm:$0xff]
    %v320 = vld [vmem:[%s3 + $0x400] sm:$0xff]
    %v321 = vld [vmem:[%s3 + $0x408] sm:$0xf]
    %v322 = vld [vmem:[%s3 + $0x40c] sm:$0xff]
    %v323 = vld [vmem:[%s3 + $0x414] sm:$0xff]
    %v324 = vld [vmem:[%s3 + $0x41c] sm:$0xff]
    %v325 = vld [vmem:[%s3 + $0x424] sm:$0xf]
    %v326 = vld [vmem:[%s3 + $0x428] sm:$0xff]
    %v327 = vld [vmem:[%s3 + $0x430] sm:$0xff]
    %v328 = vld [vmem:[%s3 + $0x438] sm:$0xff]
    %v329 = vld [vmem:[%s3 + $0x440] sm:$0xf]
    %v330 = vld [vmem:[%s3 + $0x444] sm:$0xff]
    %v331 = vld [vmem:[%s3 + $0x44c] sm:$0xff]
    %v332 = vld [vmem:[%s3 + $0x454] sm:$0xff]
    %v333 = vld [vmem:[%s3 + $0x45c] sm:$0xf]
    %v334 = vld [vmem:[%s3 + $0x460] sm:$0xff]
    %v335 = vld [vmem:[%s3 + $0x468] sm:$0xff]
    %v336 = vld [vmem:[%s3 + $0x470] sm:$0xff]
    %v337 = vld [vmem:[%s3 + $0x478] sm:$0xf]
    %v338 = vld [vmem:[%s3 + $0x47c] sm:$0xff]
    %v339 = vld [vmem:[%s3 + $0x484] sm:$0xff]
    %v340 = vld [vmem:[%s3 + $0x48c] sm:$0xff]
    %v341 = vld [vmem:[%s3 + $0x494] sm:$0xf]
    %v342 = vld [vmem:[%s3 + $0x498] sm:$0xff]
    %v343 = vld [vmem:[%s3 + $0x4a0] sm:$0xff]
    %v344 = vld [vmem:[%s3 + $0x4a8] sm:$0xff]
    %v345 = vld [vmem:[%s3 + $0x4b0] sm:$0xf]
    %v346 = vld [vmem:[%s3 + $0x4b4] sm:$0xff]
    %v347 = vld [vmem:[%s3 + $0x4bc] sm:$0xff]
    %v348 = vld [vmem:[%s3 + $0x4c4] sm:$0xff]
    %v349 = vld [vmem:[%s3 + $0x4cc] sm:$0xf]
    %v350 = vld [vmem:[%s3 + $0x4d0] sm:$0xff]
    %v351 = vld [vmem:[%s3 + $0x4d8] sm:$0xff]
    %v352 = vld [vmem:[%s3 + $0x4e0] sm:$0xff]
    %v353 = vld [vmem:[%s3 + $0x4e8] sm:$0xf]
    %v354 = vld [vmem:[%s3 + $0x4ec] sm:$0xff]
    %v355 = vld [vmem:[%s3 + $0x4f4] sm:$0xff]
    %v356 = vld [vmem:[%s3 + $0x4fc] sm:$0xff]
    %v357 = vld [vmem:[%s3 + $0x504] sm:$0xf]
    %v358 = vld [vmem:[%s3 + $0x508] sm:$0xff]
    %v359 = vld [vmem:[%s3 + $0x510] sm:$0xff]
    %v360 = vld [vmem:[%s3 + $0x518] sm:$0xff]
    %v361 = vld [vmem:[%s3 + $0x520] sm:$0xf]
    %v362 = vld [vmem:[%s3 + $0x524] sm:$0xff]
    %v363 = vld [vmem:[%s3 + $0x52c] sm:$0xff]
    %v364 = vld [vmem:[%s3 + $0x534] sm:$0xff]
    %v365 = vld [vmem:[%s3 + $0x53c] sm:$0xf]
    %v366 = vld [vmem:[%s3 + $0x540] sm:$0xff]
    %v367 = vld [vmem:[%s3 + $0x548] sm:$0xff]
    %v368 = vld [vmem:[%s3 + $0x550] sm:$0xff]
    %v369 = vld [vmem:[%s3 + $0x558] sm:$0xf]
    %v370 = vld [vmem:[%s3 + $0x55c] sm:$0xff]
    %v371 = vld [vmem:[%s3 + $0x564] sm:$0xff]
    %v372 = vld [vmem:[%s3 + $0x56c] sm:$0xff]
    %v373 = vld [vmem:[%s3 + $0x574] sm:$0xf]
    %v374 = vld [vmem:[%s3 + $0x578] sm:$0xff]
    %v375 = vld [vmem:[%s3 + $0x580] sm:$0xff]
    %v376 = vld [vmem:[%s3 + $0x588] sm:$0xff]
    %v377 = vld [vmem:[%s3 + $0x590] sm:$0xf]
    %v378 = vld [vmem:[%s3 + $0x594] sm:$0xff]
    %v379 = vld [vmem:[%s3 + $0x59c] sm:$0xff]
    %v380 = vld [vmem:[%s3 + $0x5a4] sm:$0xff]
    %v381 = vld [vmem:[%s3 + $0x5ac] sm:$0xf]
    %v382 = vld [vmem:[%s3 + $0x5b0] sm:$0xff]
    %v383 = vld [vmem:[%s3 + $0x5b8] sm:$0xff]
    %v384 = vld [vmem:[%s3 + $0x5c0] sm:$0xff]
    %v385 = vld [vmem:[%s3 + $0x5c8] sm:$0xf]
    %v386 = vld [vmem:[%s3 + $0x5cc] sm:$0xff]
    %v387 = vld [vmem:[%s3 + $0x5d4] sm:$0xff]
    %v388 = vld [vmem:[%s3 + $0x5dc] sm:$0xff]
    %v389 = vld [vmem:[%s3 + $0x5e4] sm:$0xf]
    %v390 = vld [vmem:[%s3 + $0x5e8] sm:$0xff]
    %v391 = vld [vmem:[%s3 + $0x5f0] sm:$0xff]
    %v392 = vld [vmem:[%s3 + $0x5f8] sm:$0xff]
    %v393 = vld [vmem:[%s3 + $0x600] sm:$0xf]
    %v394 = vld [vmem:[%s3 + $0x604] sm:$0xff]
    %v395 = vld [vmem:[%s3 + $0x60c] sm:$0xff]
    %v396 = vld [vmem:[%s3 + $0x614] sm:$0xff]
    %v397 = vld [vmem:[%s3 + $0x61c] sm:$0xf]
    %v398 = vld [vmem:[%s3 + $0x620] sm:$0xff]
    %v399 = vld [vmem:[%s3 + $0x628] sm:$0xff]
    %v400 = vld [vmem:[%s3 + $0x630] sm:$0xff]
    %v401 = vld [vmem:[%s3 + $0x638] sm:$0xf]
    %v402 = vld [vmem:[%s3 + $0x63c] sm:$0xff]
    %v403 = vld [vmem:[%s3 + $0x644] sm:$0xff]
    %v404 = vld [vmem:[%s3 + $0x64c] sm:$0xff]
    %v405 = vld [vmem:[%s3 + $0x654] sm:$0xf]
    %v406 = vld [vmem:[%s3 + $0x658] sm:$0xff]
    %v407 = vld [vmem:[%s3 + $0x660] sm:$0xff]
    %v408 = vld [vmem:[%s3 + $0x668] sm:$0xff]
    %v409 = vld [vmem:[%s3 + $0x670] sm:$0xf]
    %v410 = vld [vmem:[%s3 + $0x674] sm:$0xff]
    %v411 = vld [vmem:[%s3 + $0x67c] sm:$0xff]
    %v412 = vld [vmem:[%s3 + $0x684] sm:$0xff]
    %v413 = vld [vmem:[%s3 + $0x68c] sm:$0xf]
    %v414 = vld [vmem:[%s3 + $0x690] sm:$0xff]
    %v415 = vld [vmem:[%s3 + $0x698] sm:$0xff]
    %v416 = vld [vmem:[%s3 + $0x6a0] sm:$0xff]
    %v417 = vld [vmem:[%s3 + $0x6a8] sm:$0xf]
    %v418 = vld [vmem:[%s3 + $0x6ac] sm:$0xff]
    %v419 = vld [vmem:[%s3 + $0x6b4] sm:$0xff]
    %v420 = vld [vmem:[%s3 + $0x6bc] sm:$0xff]
    %v421 = vld [vmem:[%s3 + $0x6c4] sm:$0xf]
    %v422 = vld [vmem:[%s3 + $0x6c8] sm:$0xff]
    %v423 = vld [vmem:[%s3 + $0x6d0] sm:$0xff]
    %v424 = vld [vmem:[%s3 + $0x6d8] sm:$0xff]
    %v425 = vld [vmem:[%s3 + $0x6e0] sm:$0xf]
    %v426 = vld [vmem:[%s3 + $0x6e4] sm:$0xff]
    %v427 = vld [vmem:[%s3 + $0x6ec] sm:$0xff]
    %v428 = vld [vmem:[%s3 + $0x6f4] sm:$0xff]
    %v429 = vld [vmem:[%s3 + $0x6fc] sm:$0xf]
    %v430 = vld [vmem:[%s4] sm:$0x7f]
    %v432 = vlaneseq
    %v433 = vshrl.u32 %v432, 7
    %v434 = vsub.s32 0, %v433
    %v435 = vrot.slane %v430, %v434
    %v436 = vlaneseq
    %v437 = vshrl.u32 %v436, 7
    %v438 = vsub.s32 1, %v437
    %v439 = vrot.slane %v430, %v438
    %v440 = vlaneseq
    %v441 = vshrl.u32 %v440, 7
    %v442 = vsub.s32 2, %v441
    %v443 = vrot.slane %v430, %v442
    %v444 = vlaneseq
    %v445 = vshrl.u32 %v444, 7
    %v446 = vsub.s32 3, %v445
    %v447 = vrot.slane %v430, %v446
    %v448 = vlaneseq
    %v449 = vshrl.u32 %v448, 7
    %v450 = vsub.s32 4, %v449
    %v451 = vrot.slane %v430, %v450
    %v452 = vlaneseq
    %v453 = vshrl.u32 %v452, 7
    %v454 = vsub.s32 5, %v453
    %v455 = vrot.slane %v430, %v454
    %v456 = vlaneseq
    %v457 = vshrl.u32 %v456, 7
    %v458 = vsub.s32 6, %v457
    %v459 = vrot.slane %v430, %v458
    %v723 = vunpack.c.l.b16 %v174
    %v724 = vunpack.c.h.b16 %v174
    %v725 = vunpack.c.l.b16 %v175
    %v726 = vunpack.c.h.b16 %v175
    %v727 = vunpack.c.l.b16 %v176
    %v728 = vunpack.c.h.b16 %v176
    %v729 = vunpack.c.l.b16 %v177
    %v730 = vunpack.c.l.b16 %v178
    %v731 = vunpack.c.h.b16 %v178
    %v732 = vunpack.c.l.b16 %v179
    %v733 = vunpack.c.h.b16 %v179
    %v734 = vunpack.c.l.b16 %v180
    %v735 = vunpack.c.h.b16 %v180
    %v736 = vunpack.c.l.b16 %v181
    %v737 = vunpack.c.l.b16 %v182
    %v738 = vunpack.c.h.b16 %v182
    %v739 = vunpack.c.l.b16 %v183
    %v740 = vunpack.c.h.b16 %v183
    %v741 = vunpack.c.l.b16 %v184
    %v742 = vunpack.c.h.b16 %v184
    %v743 = vunpack.c.l.b16 %v185
    %v744 = vunpack.c.l.b16 %v186
    %v745 = vunpack.c.h.b16 %v186
    %v746 = vunpack.c.l.b16 %v187
    %v747 = vunpack.c.h.b16 %v187
    %v748 = vunpack.c.l.b16 %v188
    %v749 = vunpack.c.h.b16 %v188
    %v750 = vunpack.c.l.b16 %v189
    %v751 = vunpack.c.l.b16 %v190
    %v752 = vunpack.c.h.b16 %v190
    %v753 = vunpack.c.l.b16 %v191
    %v754 = vunpack.c.h.b16 %v191
    %v755 = vunpack.c.l.b16 %v192
    %v756 = vunpack.c.h.b16 %v192
    %v757 = vunpack.c.l.b16 %v193
    %v758 = vunpack.c.l.b16 %v194
    %v759 = vunpack.c.h.b16 %v194
    %v760 = vunpack.c.l.b16 %v195
    %v761 = vunpack.c.h.b16 %v195
    %v762 = vunpack.c.l.b16 %v196
    %v763 = vunpack.c.h.b16 %v196
    %v764 = vunpack.c.l.b16 %v197
    %v765 = vunpack.c.l.b16 %v198
    %v766 = vunpack.c.h.b16 %v198
    %v767 = vunpack.c.l.b16 %v199
    %v768 = vunpack.c.h.b16 %v199
    %v769 = vunpack.c.l.b16 %v200
    %v770 = vunpack.c.h.b16 %v200
    %v771 = vunpack.c.l.b16 %v201
    %v772 = vunpack.c.l.b16 %v202
    %v773 = vunpack.c.h.b16 %v202
    %v774 = vunpack.c.l.b16 %v203
    %v775 = vunpack.c.h.b16 %v203
    %v776 = vunpack.c.l.b16 %v204
    %v777 = vunpack.c.h.b16 %v204
    %v778 = vunpack.c.l.b16 %v205
    %v779 = vunpack.c.l.b16 %v206
    %v780 = vunpack.c.h.b16 %v206
    %v781 = vunpack.c.l.b16 %v207
    %v782 = vunpack.c.h.b16 %v207
    %v783 = vunpack.c.l.b16 %v208
    %v784 = vunpack.c.h.b16 %v208
    %v785 = vunpack.c.l.b16 %v209
    %v786 = vunpack.c.l.b16 %v210
    %v787 = vunpack.c.h.b16 %v210
    %v788 = vunpack.c.l.b16 %v211
    %v789 = vunpack.c.h.b16 %v211
    %v790 = vunpack.c.l.b16 %v212
    %v791 = vunpack.c.h.b16 %v212
    %v792 = vunpack.c.l.b16 %v213
    %v793 = vunpack.c.l.b16 %v214
    %v794 = vunpack.c.h.b16 %v214
    %v795 = vunpack.c.l.b16 %v215
    %v796 = vunpack.c.h.b16 %v215
    %v797 = vunpack.c.l.b16 %v216
    %v798 = vunpack.c.h.b16 %v216
    %v799 = vunpack.c.l.b16 %v217
    %v800 = vunpack.c.l.b16 %v218
    %v801 = vunpack.c.h.b16 %v218
    %v802 = vunpack.c.l.b16 %v219
    %v803 = vunpack.c.h.b16 %v219
    %v804 = vunpack.c.l.b16 %v220
    %v805 = vunpack.c.h.b16 %v220
    %v806 = vunpack.c.l.b16 %v221
    %v807 = vunpack.c.l.b16 %v222
    %v808 = vunpack.c.h.b16 %v222
    %v809 = vunpack.c.l.b16 %v223
    %v810 = vunpack.c.h.b16 %v223
    %v811 = vunpack.c.l.b16 %v224
    %v812 = vunpack.c.h.b16 %v224
    %v813 = vunpack.c.l.b16 %v225
    %v814 = vunpack.c.l.b16 %v226
    %v815 = vunpack.c.h.b16 %v226
    %v816 = vunpack.c.l.b16 %v227
    %v817 = vunpack.c.h.b16 %v227
    %v818 = vunpack.c.l.b16 %v228
    %v819 = vunpack.c.h.b16 %v228
    %v820 = vunpack.c.l.b16 %v229
    %v821 = vunpack.c.l.b16 %v230
    %v822 = vunpack.c.h.b16 %v230
    %v823 = vunpack.c.l.b16 %v231
    %v824 = vunpack.c.h.b16 %v231
    %v825 = vunpack.c.l.b16 %v232
    %v826 = vunpack.c.h.b16 %v232
    %v827 = vunpack.c.l.b16 %v233
    %v828 = vunpack.c.l.b16 %v234
    %v829 = vunpack.c.h.b16 %v234
    %v830 = vunpack.c.l.b16 %v235
    %v831 = vunpack.c.h.b16 %v235
    %v832 = vunpack.c.l.b16 %v236
    %v833 = vunpack.c.h.b16 %v236
    %v834 = vunpack.c.l.b16 %v237
    %v835 = vunpack.c.l.b16 %v238
    %v836 = vunpack.c.h.b16 %v238
    %v837 = vunpack.c.l.b16 %v239
    %v838 = vunpack.c.h.b16 %v239
    %v839 = vunpack.c.l.b16 %v240
    %v840 = vunpack.c.h.b16 %v240
    %v841 = vunpack.c.l.b16 %v241
    %v842 = vunpack.c.l.b16 %v242
    %v843 = vunpack.c.h.b16 %v242
    %v844 = vunpack.c.l.b16 %v243
    %v845 = vunpack.c.h.b16 %v243
    %v846 = vunpack.c.l.b16 %v244
    %v847 = vunpack.c.h.b16 %v244
    %v848 = vunpack.c.l.b16 %v245
    %v849 = vunpack.c.l.b16 %v246
    %v850 = vunpack.c.h.b16 %v246
    %v851 = vunpack.c.l.b16 %v247
    %v852 = vunpack.c.h.b16 %v247
    %v853 = vunpack.c.l.b16 %v248
    %v854 = vunpack.c.h.b16 %v248
    %v855 = vunpack.c.l.b16 %v249
    %v856 = vunpack.c.l.b16 %v250
    %v857 = vunpack.c.h.b16 %v250
    %v858 = vunpack.c.l.b16 %v251
    %v859 = vunpack.c.h.b16 %v251
    %v860 = vunpack.c.l.b16 %v252
    %v861 = vunpack.c.h.b16 %v252
    %v862 = vunpack.c.l.b16 %v253
    %v863 = vunpack.c.l.b16 %v254
    %v864 = vunpack.c.h.b16 %v254
    %v865 = vunpack.c.l.b16 %v255
    %v866 = vunpack.c.h.b16 %v255
    %v867 = vunpack.c.l.b16 %v256
    %v868 = vunpack.c.h.b16 %v256
    %v869 = vunpack.c.l.b16 %v257
    %v870 = vunpack.c.l.b16 %v258
    %v871 = vunpack.c.h.b16 %v258
    %v872 = vunpack.c.l.b16 %v259
    %v873 = vunpack.c.h.b16 %v259
    %v874 = vunpack.c.l.b16 %v260
    %v875 = vunpack.c.h.b16 %v260
    %v876 = vunpack.c.l.b16 %v261
    %v877 = vunpack.c.l.b16 %v262
    %v878 = vunpack.c.h.b16 %v262
    %v879 = vunpack.c.l.b16 %v263
    %v880 = vunpack.c.h.b16 %v263
    %v881 = vunpack.c.l.b16 %v264
    %v882 = vunpack.c.h.b16 %v264
    %v883 = vunpack.c.l.b16 %v265
    %v884 = vunpack.c.l.b16 %v266
    %v885 = vunpack.c.h.b16 %v266
    %v886 = vunpack.c.l.b16 %v267
    %v887 = vunpack.c.h.b16 %v267
    %v888 = vunpack.c.l.b16 %v268
    %v889 = vunpack.c.h.b16 %v268
    %v890 = vunpack.c.l.b16 %v269
    %v891 = vunpack.c.l.b16 %v270
    %v892 = vunpack.c.h.b16 %v270
    %v893 = vunpack.c.l.b16 %v271
    %v894 = vunpack.c.h.b16 %v271
    %v895 = vunpack.c.l.b16 %v272
    %v896 = vunpack.c.h.b16 %v272
    %v897 = vunpack.c.l.b16 %v273
    %v898 = vunpack.c.l.b16 %v274
    %v899 = vunpack.c.h.b16 %v274
    %v900 = vunpack.c.l.b16 %v275
    %v901 = vunpack.c.h.b16 %v275
    %v902 = vunpack.c.l.b16 %v276
    %v903 = vunpack.c.h.b16 %v276
    %v904 = vunpack.c.l.b16 %v277
    %v905 = vunpack.c.l.b16 %v278
    %v906 = vunpack.c.h.b16 %v278
    %v907 = vunpack.c.l.b16 %v279
    %v908 = vunpack.c.h.b16 %v279
    %v909 = vunpack.c.l.b16 %v280
    %v910 = vunpack.c.h.b16 %v280
    %v911 = vunpack.c.l.b16 %v281
    %v912 = vunpack.c.l.b16 %v282
    %v913 = vunpack.c.h.b16 %v282
    %v914 = vunpack.c.l.b16 %v283
    %v915 = vunpack.c.h.b16 %v283
    %v916 = vunpack.c.l.b16 %v284
    %v917 = vunpack.c.h.b16 %v284
    %v918 = vunpack.c.l.b16 %v285
    %v919 = vunpack.c.l.b16 %v286
    %v920 = vunpack.c.h.b16 %v286
    %v921 = vunpack.c.l.b16 %v287
    %v922 = vunpack.c.h.b16 %v287
    %v923 = vunpack.c.l.b16 %v288
    %v924 = vunpack.c.h.b16 %v288
    %v925 = vunpack.c.l.b16 %v289
    %v926 = vunpack.c.l.b16 %v290
    %v927 = vunpack.c.h.b16 %v290
    %v928 = vunpack.c.l.b16 %v291
    %v929 = vunpack.c.h.b16 %v291
    %v930 = vunpack.c.l.b16 %v292
    %v931 = vunpack.c.h.b16 %v292
    %v932 = vunpack.c.l.b16 %v293
    %v933 = vunpack.c.l.b16 %v294
    %v934 = vunpack.c.h.b16 %v294
    %v935 = vunpack.c.l.b16 %v295
    %v936 = vunpack.c.h.b16 %v295
    %v937 = vunpack.c.l.b16 %v296
    %v938 = vunpack.c.h.b16 %v296
    %v939 = vunpack.c.l.b16 %v297
    %v940 = vunpack.c.l.b16 %v298
    %v941 = vunpack.c.h.b16 %v298
    %v942 = vunpack.c.l.b16 %v299
    %v943 = vunpack.c.h.b16 %v299
    %v944 = vunpack.c.l.b16 %v300
    %v945 = vunpack.c.h.b16 %v300
    %v946 = vunpack.c.l.b16 %v301
    %v947 = vunpack.c.l.b16 %v302
    %v948 = vunpack.c.h.b16 %v302
    %v949 = vunpack.c.l.b16 %v303
    %v950 = vunpack.c.h.b16 %v303
    %v951 = vunpack.c.l.b16 %v304
    %v952 = vunpack.c.h.b16 %v304
    %v953 = vunpack.c.l.b16 %v305
    %v954 = vunpack.c.l.b16 %v306
    %v955 = vunpack.c.h.b16 %v306
    %v956 = vunpack.c.l.b16 %v307
    %v957 = vunpack.c.h.b16 %v307
    %v958 = vunpack.c.l.b16 %v308
    %v959 = vunpack.c.h.b16 %v308
    %v960 = vunpack.c.l.b16 %v309
    %v961 = vunpack.c.l.b16 %v310
    %v962 = vunpack.c.h.b16 %v310
    %v963 = vunpack.c.l.b16 %v311
    %v964 = vunpack.c.h.b16 %v311
    %v965 = vunpack.c.l.b16 %v312
    %v966 = vunpack.c.h.b16 %v312
    %v967 = vunpack.c.l.b16 %v313
    %v968 = vunpack.c.l.b16 %v314
    %v969 = vunpack.c.h.b16 %v314
    %v970 = vunpack.c.l.b16 %v315
    %v971 = vunpack.c.h.b16 %v315
    %v972 = vunpack.c.l.b16 %v316
    %v973 = vunpack.c.h.b16 %v316
    %v974 = vunpack.c.l.b16 %v317
    %v975 = vunpack.c.l.b16 %v318
    %v976 = vunpack.c.h.b16 %v318
    %v977 = vunpack.c.l.b16 %v319
    %v978 = vunpack.c.h.b16 %v319
    %v979 = vunpack.c.l.b16 %v320
    %v980 = vunpack.c.h.b16 %v320
    %v981 = vunpack.c.l.b16 %v321
    %v982 = vunpack.c.l.b16 %v322
    %v983 = vunpack.c.h.b16 %v322
    %v984 = vunpack.c.l.b16 %v323
    %v985 = vunpack.c.h.b16 %v323
    %v986 = vunpack.c.l.b16 %v324
    %v987 = vunpack.c.h.b16 %v324
    %v988 = vunpack.c.l.b16 %v325
    %v989 = vunpack.c.l.b16 %v326
    %v990 = vunpack.c.h.b16 %v326
    %v991 = vunpack.c.l.b16 %v327
    %v992 = vunpack.c.h.b16 %v327
    %v993 = vunpack.c.l.b16 %v328
    %v994 = vunpack.c.h.b16 %v328
    %v995 = vunpack.c.l.b16 %v329
    %v996 = vunpack.c.l.b16 %v330
    %v997 = vunpack.c.h.b16 %v330
    %v998 = vunpack.c.l.b16 %v331
    %v999 = vunpack.c.h.b16 %v331
    %v1000 = vunpack.c.l.b16 %v332
    %v1001 = vunpack.c.h.b16 %v332
    %v1002 = vunpack.c.l.b16 %v333
    %v1003 = vunpack.c.l.b16 %v334
    %v1004 = vunpack.c.h.b16 %v334
    %v1005 = vunpack.c.l.b16 %v335
    %v1006 = vunpack.c.h.b16 %v335
    %v1007 = vunpack.c.l.b16 %v336
    %v1008 = vunpack.c.h.b16 %v336
    %v1009 = vunpack.c.l.b16 %v337
    %v1010 = vunpack.c.l.b16 %v338
    %v1011 = vunpack.c.h.b16 %v338
    %v1012 = vunpack.c.l.b16 %v339
    %v1013 = vunpack.c.h.b16 %v339
    %v1014 = vunpack.c.l.b16 %v340
    %v1015 = vunpack.c.h.b16 %v340
    %v1016 = vunpack.c.l.b16 %v341
    %v1017 = vunpack.c.l.b16 %v342
    %v1018 = vunpack.c.h.b16 %v342
    %v1019 = vunpack.c.l.b16 %v343
    %v1020 = vunpack.c.h.b16 %v343
    %v1021 = vunpack.c.l.b16 %v344
    %v1022 = vunpack.c.h.b16 %v344
    %v1023 = vunpack.c.l.b16 %v345
    %v1024 = vunpack.c.l.b16 %v346
    %v1025 = vunpack.c.h.b16 %v346
    %v1026 = vunpack.c.l.b16 %v347
    %v1027 = vunpack.c.h.b16 %v347
    %v1028 = vunpack.c.l.b16 %v348
    %v1029 = vunpack.c.h.b16 %v348
    %v1030 = vunpack.c.l.b16 %v349
    %v1031 = vunpack.c.l.b16 %v350
    %v1032 = vunpack.c.h.b16 %v350
    %v1033 = vunpack.c.l.b16 %v351
    %v1034 = vunpack.c.h.b16 %v351
    %v1035 = vunpack.c.l.b16 %v352
    %v1036 = vunpack.c.h.b16 %v352
    %v1037 = vunpack.c.l.b16 %v353
    %v1038 = vunpack.c.l.b16 %v354
    %v1039 = vunpack.c.h.b16 %v354
    %v1040 = vunpack.c.l.b16 %v355
    %v1041 = vunpack.c.h.b16 %v355
    %v1042 = vunpack.c.l.b16 %v356
    %v1043 = vunpack.c.h.b16 %v356
    %v1044 = vunpack.c.l.b16 %v357
    %v1045 = vunpack.c.l.b16 %v358
    %v1046 = vunpack.c.h.b16 %v358
    %v1047 = vunpack.c.l.b16 %v359
    %v1048 = vunpack.c.h.b16 %v359
    %v1049 = vunpack.c.l.b16 %v360
    %v1050 = vunpack.c.h.b16 %v360
    %v1051 = vunpack.c.l.b16 %v361
    %v1052 = vunpack.c.l.b16 %v362
    %v1053 = vunpack.c.h.b16 %v362
    %v1054 = vunpack.c.l.b16 %v363
    %v1055 = vunpack.c.h.b16 %v363
    %v1056 = vunpack.c.l.b16 %v364
    %v1057 = vunpack.c.h.b16 %v364
    %v1058 = vunpack.c.l.b16 %v365
    %v1059 = vunpack.c.l.b16 %v366
    %v1060 = vunpack.c.h.b16 %v366
    %v1061 = vunpack.c.l.b16 %v367
    %v1062 = vunpack.c.h.b16 %v367
    %v1063 = vunpack.c.l.b16 %v368
    %v1064 = vunpack.c.h.b16 %v368
    %v1065 = vunpack.c.l.b16 %v369
    %v1066 = vunpack.c.l.b16 %v370
    %v1067 = vunpack.c.h.b16 %v370
    %v1068 = vunpack.c.l.b16 %v371
    %v1069 = vunpack.c.h.b16 %v371
    %v1070 = vunpack.c.l.b16 %v372
    %v1071 = vunpack.c.h.b16 %v372
    %v1072 = vunpack.c.l.b16 %v373
    %v1073 = vunpack.c.l.b16 %v374
    %v1074 = vunpack.c.h.b16 %v374
    %v1075 = vunpack.c.l.b16 %v375
    %v1076 = vunpack.c.h.b16 %v375
    %v1077 = vunpack.c.l.b16 %v376
    %v1078 = vunpack.c.h.b16 %v376
    %v1079 = vunpack.c.l.b16 %v377
    %v1080 = vunpack.c.l.b16 %v378
    %v1081 = vunpack.c.h.b16 %v378
    %v1082 = vunpack.c.l.b16 %v379
    %v1083 = vunpack.c.h.b16 %v379
    %v1084 = vunpack.c.l.b16 %v380
    %v1085 = vunpack.c.h.b16 %v380
    %v1086 = vunpack.c.l.b16 %v381
    %v1087 = vunpack.c.l.b16 %v382
    %v1088 = vunpack.c.h.b16 %v382
    %v1089 = vunpack.c.l.b16 %v383
    %v1090 = vunpack.c.h.b16 %v383
    %v1091 = vunpack.c.l.b16 %v384
    %v1092 = vunpack.c.h.b16 %v384
    %v1093 = vunpack.c.l.b16 %v385
    %v1094 = vunpack.c.l.b16 %v386
    %v1095 = vunpack.c.h.b16 %v386
    %v1096 = vunpack.c.l.b16 %v387
    %v1097 = vunpack.c.h.b16 %v387
    %v1098 = vunpack.c.l.b16 %v388
    %v1099 = vunpack.c.h.b16 %v388
    %v1100 = vunpack.c.l.b16 %v389
    %v1101 = vunpack.c.l.b16 %v390
    %v1102 = vunpack.c.h.b16 %v390
    %v1103 = vunpack.c.l.b16 %v391
    %v1104 = vunpack.c.h.b16 %v391
    %v1105 = vunpack.c.l.b16 %v392
    %v1106 = vunpack.c.h.b16 %v392
    %v1107 = vunpack.c.l.b16 %v393
    %v1108 = vunpack.c.l.b16 %v394
    %v1109 = vunpack.c.h.b16 %v394
    %v1110 = vunpack.c.l.b16 %v395
    %v1111 = vunpack.c.h.b16 %v395
    %v1112 = vunpack.c.l.b16 %v396
    %v1113 = vunpack.c.h.b16 %v396
    %v1114 = vunpack.c.l.b16 %v397
    %v1115 = vunpack.c.l.b16 %v398
    %v1116 = vunpack.c.h.b16 %v398
    %v1117 = vunpack.c.l.b16 %v399
    %v1118 = vunpack.c.h.b16 %v399
    %v1119 = vunpack.c.l.b16 %v400
    %v1120 = vunpack.c.h.b16 %v400
    %v1121 = vunpack.c.l.b16 %v401
    %v1122 = vunpack.c.l.b16 %v402
    %v1123 = vunpack.c.h.b16 %v402
    %v1124 = vunpack.c.l.b16 %v403
    %v1125 = vunpack.c.h.b16 %v403
    %v1126 = vunpack.c.l.b16 %v404
    %v1127 = vunpack.c.h.b16 %v404
    %v1128 = vunpack.c.l.b16 %v405
    %v1129 = vunpack.c.l.b16 %v406
    %v1130 = vunpack.c.h.b16 %v406
    %v1131 = vunpack.c.l.b16 %v407
    %v1132 = vunpack.c.h.b16 %v407
    %v1133 = vunpack.c.l.b16 %v408
    %v1134 = vunpack.c.h.b16 %v408
    %v1135 = vunpack.c.l.b16 %v409
    %v1136 = vunpack.c.l.b16 %v410
    %v1137 = vunpack.c.h.b16 %v410
    %v1138 = vunpack.c.l.b16 %v411
    %v1139 = vunpack.c.h.b16 %v411
    %v1140 = vunpack.c.l.b16 %v412
    %v1141 = vunpack.c.h.b16 %v412
    %v1142 = vunpack.c.l.b16 %v413
    %v1143 = vunpack.c.l.b16 %v414
    %v1144 = vunpack.c.h.b16 %v414
    %v1145 = vunpack.c.l.b16 %v415
    %v1146 = vunpack.c.h.b16 %v415
    %v1147 = vunpack.c.l.b16 %v416
    %v1148 = vunpack.c.h.b16 %v416
    %v1149 = vunpack.c.l.b16 %v417
    %v1150 = vunpack.c.l.b16 %v418
    %v1151 = vunpack.c.h.b16 %v418
    %v1152 = vunpack.c.l.b16 %v419
    %v1153 = vunpack.c.h.b16 %v419
    %v1154 = vunpack.c.l.b16 %v420
    %v1155 = vunpack.c.h.b16 %v420
    %v1156 = vunpack.c.l.b16 %v421
    %v1157 = vunpack.c.l.b16 %v422
    %v1158 = vunpack.c.h.b16 %v422
    %v1159 = vunpack.c.l.b16 %v423
    %v1160 = vunpack.c.h.b16 %v423
    %v1161 = vunpack.c.l.b16 %v424
    %v1162 = vunpack.c.h.b16 %v424
    %v1163 = vunpack.c.l.b16 %v425
    %v1164 = vunpack.c.l.b16 %v426
    %v1165 = vunpack.c.h.b16 %v426
    %v1166 = vunpack.c.l.b16 %v427
    %v1167 = vunpack.c.h.b16 %v427
    %v1168 = vunpack.c.l.b16 %v428
    %v1169 = vunpack.c.h.b16 %v428
    %v1170 = vunpack.c.l.b16 %v429
    %v1171 = vpack.c.b16 %v730, %v723
    %v1172 = vpack.c.b16 %v731, %v724
    %v1173 = vpack.c.b16 %v732, %v725
    %v1174 = vpack.c.b16 %v733, %v726
    %v1175 = vpack.c.b16 %v734, %v727
    %v1176 = vpack.c.b16 %v735, %v728
    %v1177 = vpack.c.b16 %v736, %v729
    %v1178 = vpack.c.b16 %v744, %v737
    %v1179 = vpack.c.b16 %v745, %v738
    %v1180 = vpack.c.b16 %v746, %v739
    %v1181 = vpack.c.b16 %v747, %v740
    %v1182 = vpack.c.b16 %v748, %v741
    %v1183 = vpack.c.b16 %v749, %v742
    %v1184 = vpack.c.b16 %v750, %v743
    %v1185 = vpack.c.b16 %v758, %v751
    %v1186 = vpack.c.b16 %v759, %v752
    %v1187 = vpack.c.b16 %v760, %v753
    %v1188 = vpack.c.b16 %v761, %v754
    %v1189 = vpack.c.b16 %v762, %v755
    %v1190 = vpack.c.b16 %v763, %v756
    %v1191 = vpack.c.b16 %v764, %v757
    %v1192 = vpack.c.b16 %v772, %v765
    %v1193 = vpack.c.b16 %v773, %v766
    %v1194 = vpack.c.b16 %v774, %v767
    %v1195 = vpack.c.b16 %v775, %v768
    %v1196 = vpack.c.b16 %v776, %v769
    %v1197 = vpack.c.b16 %v777, %v770
    %v1198 = vpack.c.b16 %v778, %v771
    %v1199 = vpack.c.b16 %v786, %v779
    %v1200 = vpack.c.b16 %v787, %v780
    %v1201 = vpack.c.b16 %v788, %v781
    %v1202 = vpack.c.b16 %v789, %v782
    %v1203 = vpack.c.b16 %v790, %v783
    %v1204 = vpack.c.b16 %v791, %v784
    %v1205 = vpack.c.b16 %v792, %v785
    %v1206 = vpack.c.b16 %v800, %v793
    %v1207 = vpack.c.b16 %v801, %v794
    %v1208 = vpack.c.b16 %v802, %v795
    %v1209 = vpack.c.b16 %v803, %v796
    %v1210 = vpack.c.b16 %v804, %v797
    %v1211 = vpack.c.b16 %v805, %v798
    %v1212 = vpack.c.b16 %v806, %v799
    %v1213 = vpack.c.b16 %v814, %v807
    %v1214 = vpack.c.b16 %v815, %v808
    %v1215 = vpack.c.b16 %v816, %v809
    %v1216 = vpack.c.b16 %v817, %v810
    %v1217 = vpack.c.b16 %v818, %v811
    %v1218 = vpack.c.b16 %v819, %v812
    %v1219 = vpack.c.b16 %v820, %v813
    %v1220 = vpack.c.b16 %v828, %v821
    %v1221 = vpack.c.b16 %v829, %v822
    %v1222 = vpack.c.b16 %v830, %v823
    %v1223 = vpack.c.b16 %v831, %v824
    %v1224 = vpack.c.b16 %v832, %v825
    %v1225 = vpack.c.b16 %v833, %v826
    %v1226 = vpack.c.b16 %v834, %v827
    %v1227 = vpack.c.b16 %v842, %v835
    %v1228 = vpack.c.b16 %v843, %v836
    %v1229 = vpack.c.b16 %v844, %v837
    %v1230 = vpack.c.b16 %v845, %v838
    %v1231 = vpack.c.b16 %v846, %v839
    %v1232 = vpack.c.b16 %v847, %v840
    %v1233 = vpack.c.b16 %v848, %v841
    %v1234 = vpack.c.b16 %v856, %v849
    %v1235 = vpack.c.b16 %v857, %v850
    %v1236 = vpack.c.b16 %v858, %v851
    %v1237 = vpack.c.b16 %v859, %v852
    %v1238 = vpack.c.b16 %v860, %v853
    %v1239 = vpack.c.b16 %v861, %v854
    %v1240 = vpack.c.b16 %v862, %v855
    %v1241 = vpack.c.b16 %v870, %v863
    %v1242 = vpack.c.b16 %v871, %v864
    %v1243 = vpack.c.b16 %v872, %v865
    %v1244 = vpack.c.b16 %v873, %v866
    %v1245 = vpack.c.b16 %v874, %v867
    %v1246 = vpack.c.b16 %v875, %v868
    %v1247 = vpack.c.b16 %v876, %v869
    %v1248 = vpack.c.b16 %v884, %v877
    %v1249 = vpack.c.b16 %v885, %v878
    %v1250 = vpack.c.b16 %v886, %v879
    %v1251 = vpack.c.b16 %v887, %v880
    %v1252 = vpack.c.b16 %v888, %v881
    %v1253 = vpack.c.b16 %v889, %v882
    %v1254 = vpack.c.b16 %v890, %v883
    %v1255 = vpack.c.b16 %v898, %v891
    %v1256 = vpack.c.b16 %v899, %v892
    %v1257 = vpack.c.b16 %v900, %v893
    %v1258 = vpack.c.b16 %v901, %v894
    %v1259 = vpack.c.b16 %v902, %v895
    %v1260 = vpack.c.b16 %v903, %v896
    %v1261 = vpack.c.b16 %v904, %v897
    %v1262 = vpack.c.b16 %v912, %v905
    %v1263 = vpack.c.b16 %v913, %v906
    %v1264 = vpack.c.b16 %v914, %v907
    %v1265 = vpack.c.b16 %v915, %v908
    %v1266 = vpack.c.b16 %v916, %v909
    %v1267 = vpack.c.b16 %v917, %v910
    %v1268 = vpack.c.b16 %v918, %v911
    %v1269 = vpack.c.b16 %v926, %v919
    %v1270 = vpack.c.b16 %v927, %v920
    %v1271 = vpack.c.b16 %v928, %v921
    %v1272 = vpack.c.b16 %v929, %v922
    %v1273 = vpack.c.b16 %v930, %v923
    %v1274 = vpack.c.b16 %v931, %v924
    %v1275 = vpack.c.b16 %v932, %v925
    %v1276 = vpack.c.b16 %v940, %v933
    %v1277 = vpack.c.b16 %v941, %v934
    %v1278 = vpack.c.b16 %v942, %v935
    %v1279 = vpack.c.b16 %v943, %v936
    %v1280 = vpack.c.b16 %v944, %v937
    %v1281 = vpack.c.b16 %v945, %v938
    %v1282 = vpack.c.b16 %v946, %v939
    %v1283 = vpack.c.b16 %v954, %v947
    %v1284 = vpack.c.b16 %v955, %v948
    %v1285 = vpack.c.b16 %v956, %v949
    %v1286 = vpack.c.b16 %v957, %v950
    %v1287 = vpack.c.b16 %v958, %v951
    %v1288 = vpack.c.b16 %v959, %v952
    %v1289 = vpack.c.b16 %v960, %v953
    %v1290 = vpack.c.b16 %v968, %v961
    %v1291 = vpack.c.b16 %v969, %v962
    %v1292 = vpack.c.b16 %v970, %v963
    %v1293 = vpack.c.b16 %v971, %v964
    %v1294 = vpack.c.b16 %v972, %v965
    %v1295 = vpack.c.b16 %v973, %v966
    %v1296 = vpack.c.b16 %v974, %v967
    %v1297 = vpack.c.b16 %v982, %v975
    %v1298 = vpack.c.b16 %v983, %v976
    %v1299 = vpack.c.b16 %v984, %v977
    %v1300 = vpack.c.b16 %v985, %v978
    %v1301 = vpack.c.b16 %v986, %v979
    %v1302 = vpack.c.b16 %v987, %v980
    %v1303 = vpack.c.b16 %v988, %v981
    %v1304 = vpack.c.b16 %v996, %v989
    %v1305 = vpack.c.b16 %v997, %v990
    %v1306 = vpack.c.b16 %v998, %v991
    %v1307 = vpack.c.b16 %v999, %v992
    %v1308 = vpack.c.b16 %v1000, %v993
    %v1309 = vpack.c.b16 %v1001, %v994
    %v1310 = vpack.c.b16 %v1002, %v995
    %v1311 = vpack.c.b16 %v1010, %v1003
    %v1312 = vpack.c.b16 %v1011, %v1004
    %v1313 = vpack.c.b16 %v1012, %v1005
    %v1314 = vpack.c.b16 %v1013, %v1006
    %v1315 = vpack.c.b16 %v1014, %v1007
    %v1316 = vpack.c.b16 %v1015, %v1008
    %v1317 = vpack.c.b16 %v1016, %v1009
    %v1318 = vpack.c.b16 %v1024, %v1017
    %v1319 = vpack.c.b16 %v1025, %v1018
    %v1320 = vpack.c.b16 %v1026, %v1019
    %v1321 = vpack.c.b16 %v1027, %v1020
    %v1322 = vpack.c.b16 %v1028, %v1021
    %v1323 = vpack.c.b16 %v1029, %v1022
    %v1324 = vpack.c.b16 %v1030, %v1023
    %v1325 = vpack.c.b16 %v1038, %v1031
    %v1326 = vpack.c.b16 %v1039, %v1032
    %v1327 = vpack.c.b16 %v1040, %v1033
    %v1328 = vpack.c.b16 %v1041, %v1034
    %v1329 = vpack.c.b16 %v1042, %v1035
    %v1330 = vpack.c.b16 %v1043, %v1036
    %v1331 = vpack.c.b16 %v1044, %v1037
    %v1332 = vpack.c.b16 %v1052, %v1045
    %v1333 = vpack.c.b16 %v1053, %v1046
    %v1334 = vpack.c.b16 %v1054, %v1047
    %v1335 = vpack.c.b16 %v1055, %v1048
    %v1336 = vpack.c.b16 %v1056, %v1049
    %v1337 = vpack.c.b16 %v1057, %v1050
    %v1338 = vpack.c.b16 %v1058, %v1051
    %v1339 = vpack.c.b16 %v1066, %v1059
    %v1340 = vpack.c.b16 %v1067, %v1060
    %v1341 = vpack.c.b16 %v1068, %v1061
    %v1342 = vpack.c.b16 %v1069, %v1062
    %v1343 = vpack.c.b16 %v1070, %v1063
    %v1344 = vpack.c.b16 %v1071, %v1064
    %v1345 = vpack.c.b16 %v1072, %v1065
    %v1346 = vpack.c.b16 %v1080, %v1073
    %v1347 = vpack.c.b16 %v1081, %v1074
    %v1348 = vpack.c.b16 %v1082, %v1075
    %v1349 = vpack.c.b16 %v1083, %v1076
    %v1350 = vpack.c.b16 %v1084, %v1077
    %v1351 = vpack.c.b16 %v1085, %v1078
    %v1352 = vpack.c.b16 %v1086, %v1079
    %v1353 = vpack.c.b16 %v1094, %v1087
    %v1354 = vpack.c.b16 %v1095, %v1088
    %v1355 = vpack.c.b16 %v1096, %v1089
    %v1356 = vpack.c.b16 %v1097, %v1090
    %v1357 = vpack.c.b16 %v1098, %v1091
    %v1358 = vpack.c.b16 %v1099, %v1092
    %v1359 = vpack.c.b16 %v1100, %v1093
    %v1360 = vpack.c.b16 %v1108, %v1101
    %v1361 = vpack.c.b16 %v1109, %v1102
    %v1362 = vpack.c.b16 %v1110, %v1103
    %v1363 = vpack.c.b16 %v1111, %v1104
    %v1364 = vpack.c.b16 %v1112, %v1105
    %v1365 = vpack.c.b16 %v1113, %v1106
    %v1366 = vpack.c.b16 %v1114, %v1107
    %v1367 = vpack.c.b16 %v1122, %v1115
    %v1368 = vpack.c.b16 %v1123, %v1116
    %v1369 = vpack.c.b16 %v1124, %v1117
    %v1370 = vpack.c.b16 %v1125, %v1118
    %v1371 = vpack.c.b16 %v1126, %v1119
    %v1372 = vpack.c.b16 %v1127, %v1120
    %v1373 = vpack.c.b16 %v1128, %v1121
    %v1374 = vpack.c.b16 %v1136, %v1129
    %v1375 = vpack.c.b16 %v1137, %v1130
    %v1376 = vpack.c.b16 %v1138, %v1131
    %v1377 = vpack.c.b16 %v1139, %v1132
    %v1378 = vpack.c.b16 %v1140, %v1133
    %v1379 = vpack.c.b16 %v1141, %v1134
    %v1380 = vpack.c.b16 %v1142, %v1135
    %v1381 = vpack.c.b16 %v1150, %v1143
    %v1382 = vpack.c.b16 %v1151, %v1144
    %v1383 = vpack.c.b16 %v1152, %v1145
    %v1384 = vpack.c.b16 %v1153, %v1146
    %v1385 = vpack.c.b16 %v1154, %v1147
    %v1386 = vpack.c.b16 %v1155, %v1148
    %v1387 = vpack.c.b16 %v1156, %v1149
    %v1388 = vpack.c.b16 %v1164, %v1157
    %v1389 = vpack.c.b16 %v1165, %v1158
    %v1390 = vpack.c.b16 %v1166, %v1159
    %v1391 = vpack.c.b16 %v1167, %v1160
    %v1392 = vpack.c.b16 %v1168, %v1161
    %v1393 = vpack.c.b16 %v1169, %v1162
    %v1394 = vpack.c.b16 %v1170, %v1163
    %1619 = vmatprep.subr.bf16.mxu0 %v1172
    %1620 = vmatpush1.bf16.msra.mxu0 %v1171
    %1621 = vmatprep.subr.bf16.mxu0 %v1179
    %1622 = vmatpush1.bf16.msra.mxu0 %v1178
    %1623 = vmatprep.subr.bf16.mxu0 %v1186
    %1624 = vmatpush1.bf16.msra.mxu0 %v1185
    %1625 = vmatprep.subr.bf16.mxu0 %v1193
    %1626 = vmatpush1.bf16.msra.mxu0 %v1192
    %1627 = vmatprep.subr.bf16.mxu0 %v1200
    %1628 = vmatpush1.bf16.msra.mxu0 %v1199
    %1629 = vmatprep.subr.bf16.mxu0 %v1207
    %1630 = vmatpush1.bf16.msra.mxu0 %v1206
    %1631 = vmatprep.subr.bf16.mxu0 %v1214
    %1632 = vmatpush1.bf16.msra.mxu0 %v1213
    %1633 = vmatprep.subr.bf16.mxu0 %v1221
    %1634 = vmatpush1.bf16.msra.mxu0 %v1220
    %1635 = vmatprep.subr.bf16.mxu0 %v1228
    %1636 = vmatpush1.bf16.msra.mxu0 %v1227
    %1637 = vmatprep.subr.bf16.mxu0 %v1235
    %1638 = vmatpush1.bf16.msra.mxu0 %v1234
    %1639 = vmatprep.subr.bf16.mxu0 %v1242
    %1640 = vmatpush1.bf16.msra.mxu0 %v1241
    %1641 = vmatprep.subr.bf16.mxu0 %v1249
    %1642 = vmatpush1.bf16.msra.mxu0 %v1248
    %1643 = vmatprep.subr.bf16.mxu0 %v1256
    %1644 = vmatpush1.bf16.msra.mxu0 %v1255
    %1645 = vmatprep.subr.bf16.mxu0 %v1263
    %1646 = vmatpush1.bf16.msra.mxu0 %v1262
    %1647 = vmatprep.subr.bf16.mxu0 %v1270
    %1648 = vmatpush1.bf16.msra.mxu0 %v1269
    %1649 = vmatprep.subr.bf16.mxu0 %v1277
    %1650 = vmatpush1.bf16.msra.mxu0 %v1276
    %1651 = vmatprep.mubr.bf16.mxu0 %v171
    %1652 = vmatmul.mubr.bf16.gmra.mrb[0].mxu0 %v170
    %v1653 = vpop.f32.mrb[0].mxu0
    %v1654 = vadd.f32 %v435, %v1653
    %v1655 = vpop.f32.mrb[0].mxu0
    %v1656 = vadd.f32 %v439, %v1655
    %v1657 = vpop.f32.mrb[0].mxu0
    %v1658 = vadd.f32 %v435, %v1657
    %v1659 = vpop.f32.mrb[0].mxu0
    %v1660 = vadd.f32 %v439, %v1659
    %1661 = vdwg.mxu0
    %1662 = vmatprep.subr.bf16.mxu0 %v1284
    %1663 = vmatpush1.bf16.msra.mxu0 %v1283
    %1664 = vmatprep.subr.bf16.mxu0 %v1291
    %1665 = vmatpush1.bf16.msra.mxu0 %v1290
    %1666 = vmatprep.subr.bf16.mxu0 %v1298
    %1667 = vmatpush1.bf16.msra.mxu0 %v1297
    %1668 = vmatprep.subr.bf16.mxu0 %v1305
    %1669 = vmatpush1.bf16.msra.mxu0 %v1304
    %1670 = vmatprep.subr.bf16.mxu0 %v1312
    %1671 = vmatpush1.bf16.msra.mxu0 %v1311
    %1672 = vmatprep.subr.bf16.mxu0 %v1319
    %1673 = vmatpush1.bf16.msra.mxu0 %v1318
    %1674 = vmatprep.subr.bf16.mxu0 %v1326
    %1675 = vmatpush1.bf16.msra.mxu0 %v1325
    %1676 = vmatprep.subr.bf16.mxu0 %v1333
    %1677 = vmatpush1.bf16.msra.mxu0 %v1332
    %1678 = vmatprep.subr.bf16.mxu0 %v1340
    %1679 = vmatpush1.bf16.msra.mxu0 %v1339
    %1680 = vmatprep.subr.bf16.mxu0 %v1347
    %1681 = vmatpush1.bf16.msra.mxu0 %v1346
    %1682 = vmatprep.subr.bf16.mxu0 %v1354
    %1683 = vmatpush1.bf16.msra.mxu0 %v1353
    %1684 = vmatprep.subr.bf16.mxu0 %v1361
    %1685 = vmatpush1.bf16.msra.mxu0 %v1360
    %1686 = vmatprep.subr.bf16.mxu0 %v1368
    %1687 = vmatpush1.bf16.msra.mxu0 %v1367
    %1688 = vmatprep.subr.bf16.mxu0 %v1375
    %1689 = vmatpush1.bf16.msra.mxu0 %v1374
    %1690 = vmatprep.subr.bf16.mxu0 %v1382
    %1691 = vmatpush1.bf16.msra.mxu0 %v1381
    %1692 = vmatprep.subr.bf16.mxu0 %v1389
    %1693 = vmatpush1.bf16.msra.mxu0 %v1388
    %1694 = vmatprep.mubr.bf16.mxu0 %v173
    %1695 = vmatmul.mubr.bf16.gmra.mrb[0].mxu0 %v172
    %v1696 = vpop.f32.mrb[0].mxu0
    %v1697 = vadd.f32 %v1654, %v1696
    %v1698 = vpop.f32.mrb[0].mxu0
    %v1699 = vadd.f32 %v1656, %v1698
    %v1700 = vpop.f32.mrb[0].mxu0
    %v1701 = vadd.f32 %v1658, %v1700
    %v1702 = vpop.f32.mrb[0].mxu0
    %v1703 = vadd.f32 %v1660, %v1702
    %1704 = vdwg.mxu0
    %1705 = vmatprep.subr.bf16.mxu0 %v1174
    %1706 = vmatpush1.bf16.msra.mxu0 %v1173
    %1707 = vmatprep.subr.bf16.mxu0 %v1181
    %1708 = vmatpush1.bf16.msra.mxu0 %v1180
    %1709 = vmatprep.subr.bf16.mxu0 %v1188
    %1710 = vmatpush1.bf16.msra.mxu0 %v1187
    %1711 = vmatprep.subr.bf16.mxu0 %v1195
    %1712 = vmatpush1.bf16.msra.mxu0 %v1194
    %1713 = vmatprep.subr.bf16.mxu0 %v1202
    %1714 = vmatpush1.bf16.msra.mxu0 %v1201
    %1715 = vmatprep.subr.bf16.mxu0 %v1209
    %1716 = vmatpush1.bf16.msra.mxu0 %v1208
    %1717 = vmatprep.subr.bf16.mxu0 %v1216
    %1718 = vmatpush1.bf16.msra.mxu0 %v1215
    %1719 = vmatprep.subr.bf16.mxu0 %v1223
    %1720 = vmatpush1.bf16.msra.mxu0 %v1222
    %1721 = vmatprep.subr.bf16.mxu0 %v1230
    %1722 = vmatpush1.bf16.msra.mxu0 %v1229
    %1723 = vmatprep.subr.bf16.mxu0 %v1237
    %1724 = vmatpush1.bf16.msra.mxu0 %v1236
    %1725 = vmatprep.subr.bf16.mxu0 %v1244
    %1726 = vmatpush1.bf16.msra.mxu0 %v1243
    %1727 = vmatprep.subr.bf16.mxu0 %v1251
    %1728 = vmatpush1.bf16.msra.mxu0 %v1250
    %1729 = vmatprep.subr.bf16.mxu0 %v1258
    %1730 = vmatpush1.bf16.msra.mxu0 %v1257
    %1731 = vmatprep.subr.bf16.mxu0 %v1265
    %1732 = vmatpush1.bf16.msra.mxu0 %v1264
    %1733 = vmatprep.subr.bf16.mxu0 %v1272
    %1734 = vmatpush1.bf16.msra.mxu0 %v1271
    %1735 = vmatprep.subr.bf16.mxu0 %v1279
    %1736 = vmatpush1.bf16.msra.mxu0 %v1278
    %1737 = vmatprep.mubr.bf16.mxu0 %v171
    %1738 = vmatmul.mubr.bf16.gmra.mrb[0].mxu0 %v170
    %v1739 = vpop.f32.mrb[0].mxu0
    %v1740 = vadd.f32 %v443, %v1739
    %v1741 = vpop.f32.mrb[0].mxu0
    %v1742 = vadd.f32 %v447, %v1741
    %v1743 = vpop.f32.mrb[0].mxu0
    %v1744 = vadd.f32 %v443, %v1743
    %v1745 = vpop.f32.mrb[0].mxu0
    %v1746 = vadd.f32 %v447, %v1745
    %1747 = vdwg.mxu0
    %1748 = vmatprep.subr.bf16.mxu0 %v1286
    %1749 = vmatpush1.bf16.msra.mxu0 %v1285
    %1750 = vmatprep.subr.bf16.mxu0 %v1293
    %1751 = vmatpush1.bf16.msra.mxu0 %v1292
    %1752 = vmatprep.subr.bf16.mxu0 %v1300
    %1753 = vmatpush1.bf16.msra.mxu0 %v1299
    %1754 = vmatprep.subr.bf16.mxu0 %v1307
    %1755 = vmatpush1.bf16.msra.mxu0 %v1306
    %1756 = vmatprep.subr.bf16.mxu0 %v1314
    %1757 = vmatpush1.bf16.msra.mxu0 %v1313
    %1758 = vmatprep.subr.bf16.mxu0 %v1321
    %1759 = vmatpush1.bf16.msra.mxu0 %v1320
    %1760 = vmatprep.subr.bf16.mxu0 %v1328
    %1761 = vmatpush1.bf16.msra.mxu0 %v1327
    %1762 = vmatprep.subr.bf16.mxu0 %v1335
    %1763 = vmatpush1.bf16.msra.mxu0 %v1334
    %1764 = vmatprep.subr.bf16.mxu0 %v1342
    %1765 = vmatpush1.bf16.msra.mxu0 %v1341
    %1766 = vmatprep.subr.bf16.mxu0 %v1349
    %1767 = vmatpush1.bf16.msra.mxu0 %v1348
    %1768 = vmatprep.subr.bf16.mxu0 %v1356
    %1769 = vmatpush1.bf16.msra.mxu0 %v1355
    %1770 = vmatprep.subr.bf16.mxu0 %v1363
    %1771 = vmatpush1.bf16.msra.mxu0 %v1362
    %1772 = vmatprep.subr.bf16.mxu0 %v1370
    %1773 = vmatpush1.bf16.msra.mxu0 %v1369
    %1774 = vmatprep.subr.bf16.mxu0 %v1377
    %1775 = vmatpush1.bf16.msra.mxu0 %v1376
    %1776 = vmatprep.subr.bf16.mxu0 %v1384
    %1777 = vmatpush1.bf16.msra.mxu0 %v1383
    %1778 = vmatprep.subr.bf16.mxu0 %v1391
    %1779 = vmatpush1.bf16.msra.mxu0 %v1390
    %1780 = vmatprep.mubr.bf16.mxu0 %v173
    %1781 = vmatmul.mubr.bf16.gmra.mrb[0].mxu0 %v172
    %v1782 = vpop.f32.mrb[0].mxu0
    %v1783 = vadd.f32 %v1740, %v1782
    %v1784 = vpop.f32.mrb[0].mxu0
    %v1785 = vadd.f32 %v1742, %v1784
    %v1786 = vpop.f32.mrb[0].mxu0
    %v1787 = vadd.f32 %v1744, %v1786
    %v1788 = vpop.f32.mrb[0].mxu0
    %v1789 = vadd.f32 %v1746, %v1788
    %1790 = vdwg.mxu0
    %1791 = vmatprep.subr.bf16.mxu0 %v1176
    %1792 = vmatpush1.bf16.msra.mxu0 %v1175
    %1793 = vmatprep.subr.bf16.mxu0 %v1183
    %1794 = vmatpush1.bf16.msra.mxu0 %v1182
    %1795 = vmatprep.subr.bf16.mxu0 %v1190
    %1796 = vmatpush1.bf16.msra.mxu0 %v1189
    %1797 = vmatprep.subr.bf16.mxu0 %v1197
    %1798 = vmatpush1.bf16.msra.mxu0 %v1196
    %1799 = vmatprep.subr.bf16.mxu0 %v1204
    %1800 = vmatpush1.bf16.msra.mxu0 %v1203
    %1801 = vmatprep.subr.bf16.mxu0 %v1211
    %1802 = vmatpush1.bf16.msra.mxu0 %v1210
    %1803 = vmatprep.subr.bf16.mxu0 %v1218
    %1804 = vmatpush1.bf16.msra.mxu0 %v1217
    %1805 = vmatprep.subr.bf16.mxu0 %v1225
    %1806 = vmatpush1.bf16.msra.mxu0 %v1224
    %1807 = vmatprep.subr.bf16.mxu0 %v1232
    %1808 = vmatpush1.bf16.msra.mxu0 %v1231
    %1809 = vmatprep.subr.bf16.mxu0 %v1239
    %1810 = vmatpush1.bf16.msra.mxu0 %v1238
    %1811 = vmatprep.subr.bf16.mxu0 %v1246
    %1812 = vmatpush1.bf16.msra.mxu0 %v1245
    %1813 = vmatprep.subr.bf16.mxu0 %v1253
    %1814 = vmatpush1.bf16.msra.mxu0 %v1252
    %1815 = vmatprep.subr.bf16.mxu0 %v1260
    %1816 = vmatpush1.bf16.msra.mxu0 %v1259
    %1817 = vmatprep.subr.bf16.mxu0 %v1267
    %1818 = vmatpush1.bf16.msra.mxu0 %v1266
    %1819 = vmatprep.subr.bf16.mxu0 %v1274
    %1820 = vmatpush1.bf16.msra.mxu0 %v1273
    %1821 = vmatprep.subr.bf16.mxu0 %v1281
    %1822 = vmatpush1.bf16.msra.mxu0 %v1280
    %1823 = vmatprep.mubr.bf16.mxu0 %v171
    %1824 = vmatmul.mubr.bf16.gmra.mrb[0].mxu0 %v170
    %v1825 = vpop.f32.mrb[0].mxu0
    %v1826 = vadd.f32 %v451, %v1825
    %v1827 = vpop.f32.mrb[0].mxu0
    %v1828 = vadd.f32 %v455, %v1827
    %v1829 = vpop.f32.mrb[0].mxu0
    %v1830 = vadd.f32 %v451, %v1829
    %v1831 = vpop.f32.mrb[0].mxu0
    %v1832 = vadd.f32 %v455, %v1831
    %1833 = vdwg.mxu0
    %1834 = vmatprep.subr.bf16.mxu0 %v1288
    %1835 = vmatpush1.bf16.msra.mxu0 %v1287
    %1836 = vmatprep.subr.bf16.mxu0 %v1295
    %1837 = vmatpush1.bf16.msra.mxu0 %v1294
    %1838 = vmatprep.subr.bf16.mxu0 %v1302
    %1839 = vmatpush1.bf16.msra.mxu0 %v1301
    %1840 = vmatprep.subr.bf16.mxu0 %v1309
    %1841 = vmatpush1.bf16.msra.mxu0 %v1308
    %1842 = vmatprep.subr.bf16.mxu0 %v1316
    %1843 = vmatpush1.bf16.msra.mxu0 %v1315
    %1844 = vmatprep.subr.bf16.mxu0 %v1323
    %1845 = vmatpush1.bf16.msra.mxu0 %v1322
    %1846 = vmatprep.subr.bf16.mxu0 %v1330
    %1847 = vmatpush1.bf16.msra.mxu0 %v1329
    %1848 = vmatprep.subr.bf16.mxu0 %v1337
    %1849 = vmatpush1.bf16.msra.mxu0 %v1336
    %1850 = vmatprep.subr.bf16.mxu0 %v1344
    %1851 = vmatpush1.bf16.msra.mxu0 %v1343
    %1852 = vmatprep.subr.bf16.mxu0 %v1351
    %1853 = vmatpush1.bf16.msra.mxu0 %v1350
    %1854 = vmatprep.subr.bf16.mxu0 %v1358
    %1855 = vmatpush1.bf16.msra.mxu0 %v1357
    %1856 = vmatprep.subr.bf16.mxu0 %v1365
    %1857 = vmatpush1.bf16.msra.mxu0 %v1364
    %1858 = vmatprep.subr.bf16.mxu0 %v1372
    %1859 = vmatpush1.bf16.msra.mxu0 %v1371
    %1860 = vmatprep.subr.bf16.mxu0 %v1379
    %1861 = vmatpush1.bf16.msra.mxu0 %v1378
    %1862 = vmatprep.subr.bf16.mxu0 %v1386
    %1863 = vmatpush1.bf16.msra.mxu0 %v1385
    %1864 = vmatprep.subr.bf16.mxu0 %v1393
    %1865 = vmatpush1.bf16.msra.mxu0 %v1392
    %1866 = vmatprep.mubr.bf16.mxu0 %v173
    %1867 = vmatmul.mubr.bf16.gmra.mrb[0].mxu0 %v172
    %v1868 = vpop.f32.mrb[0].mxu0
    %v1869 = vadd.f32 %v1826, %v1868
    %v1870 = vpop.f32.mrb[0].mxu0
    %v1871 = vadd.f32 %v1828, %v1870
    %v1872 = vpop.f32.mrb[0].mxu0
    %v1873 = vadd.f32 %v1830, %v1872
    %v1874 = vpop.f32.mrb[0].mxu0
    %v1875 = vadd.f32 %v1832, %v1874
    %1876 = vdwg.mxu0
    %1877 = vmatprep.subr.bf16.mxu0 0
    %1878 = vmatpush1.bf16.msra.mxu0 %v1177
    %1879 = vmatprep.subr.bf16.mxu0 0
    %1880 = vmatpush1.bf16.msra.mxu0 %v1184
    %1881 = vmatprep.subr.bf16.mxu0 0
    %1882 = vmatpush1.bf16.msra.mxu0 %v1191
    %1883 = vmatprep.subr.bf16.mxu0 0
    %1884 = vmatpush1.bf16.msra.mxu0 %v1198
    %1885 = vmatprep.subr.bf16.mxu0 0
    %1886 = vmatpush1.bf16.msra.mxu0 %v1205
    %1887 = vmatprep.subr.bf16.mxu0 0
    %1888 = vmatpush1.bf16.msra.mxu0 %v1212
    %1889 = vmatprep.subr.bf16.mxu0 0
    %1890 = vmatpush1.bf16.msra.mxu0 %v1219
    %1891 = vmatprep.subr.bf16.mxu0 0
    %1892 = vmatpush1.bf16.msra.mxu0 %v1226
    %1893 = vmatprep.subr.bf16.mxu0 0
    %1894 = vmatpush1.bf16.msra.mxu0 %v1233
    %1895 = vmatprep.subr.bf16.mxu0 0
    %1896 = vmatpush1.bf16.msra.mxu0 %v1240
    %1897 = vmatprep.subr.bf16.mxu0 0
    %1898 = vmatpush1.bf16.msra.mxu0 %v1247
    %1899 = vmatprep.subr.bf16.mxu0 0
    %1900 = vmatpush1.bf16.msra.mxu0 %v1254
    %1901 = vmatprep.subr.bf16.mxu0 0
    %1902 = vmatpush1.bf16.msra.mxu0 %v1261
    %1903 = vmatprep.subr.bf16.mxu0 0
    %1904 = vmatpush1.bf16.msra.mxu0 %v1268
    %1905 = vmatprep.subr.bf16.mxu0 0
    %1906 = vmatpush1.bf16.msra.mxu0 %v1275
    %1907 = vmatprep.subr.bf16.mxu0 0
    %1908 = vmatpush1.bf16.msra.mxu0 %v1282
    %1909 = vmatprep.mubr.bf16.mxu0 %v171
    %1910 = vmatmul.mubr.bf16.gmra.mrb[0].mxu0 %v170
    %v1911 = vpop.f32.mrb[0].mxu0
    %v1912 = vadd.f32 %v459, %v1911
    %v1913 = vpop.f32.mrb[0].mxu0
    %v1914 = vpop.f32.mrb[0].mxu0
    %v1915 = vadd.f32 %v459, %v1914
    %v1916 = vpop.f32.mrb[0].mxu0
    %1917 = vdwg.mxu0
    %1918 = vmatprep.subr.bf16.mxu0 0
    %1919 = vmatpush1.bf16.msra.mxu0 %v1289
    %1920 = vmatprep.subr.bf16.mxu0 0
    %1921 = vmatpush1.bf16.msra.mxu0 %v1296
    %1922 = vmatprep.subr.bf16.mxu0 0
    %1923 = vmatpush1.bf16.msra.mxu0 %v1303
    %1924 = vmatprep.subr.bf16.mxu0 0
    %1925 = vmatpush1.bf16.msra.mxu0 %v1310
    %1926 = vmatprep.subr.bf16.mxu0 0
    %1927 = vmatpush1.bf16.msra.mxu0 %v1317
    %1928 = vmatprep.subr.bf16.mxu0 0
    %1929 = vmatpush1.bf16.msra.mxu0 %v1324
    %1930 = vmatprep.subr.bf16.mxu0 0
    %1931 = vmatpush1.bf16.msra.mxu0 %v1331
    %1932 = vmatprep.subr.bf16.mxu0 0
    %1933 = vmatpush1.bf16.msra.mxu0 %v1338
    %1934 = vmatprep.subr.bf16.mxu0 0
    %1935 = vmatpush1.bf16.msra.mxu0 %v1345
    %1936 = vmatprep.subr.bf16.mxu0 0
    %1937 = vmatpush1.bf16.msra.mxu0 %v1352
    %1938 = vmatprep.subr.bf16.mxu0 0
    %1939 = vmatpush1.bf16.msra.mxu0 %v1359
    %1940 = vmatprep.subr.bf16.mxu0 0
    %1941 = vmatpush1.bf16.msra.mxu0 %v1366
    %1942 = vmatprep.subr.bf16.mxu0 0
    %1943 = vmatpush1.bf16.msra.mxu0 %v1373
    %1944 = vmatprep.subr.bf16.mxu0 0
    %1945 = vmatpush1.bf16.msra.mxu0 %v1380
    %1946 = vmatprep.subr.bf16.mxu0 0
    %1947 = vmatpush1.bf16.msra.mxu0 %v1387
    %1948 = vmatprep.subr.bf16.mxu0 0
    %1949 = vmatpush1.bf16.msra.mxu0 %v1394
    %1950 = vmatprep.mubr.bf16.mxu0 %v173
    %1951 = vmatmul.mubr.bf16.gmra.mrb[0].mxu0 %v172
    %v1952 = vpop.f32.mrb[0].mxu0
    %v1953 = vadd.f32 %v1912, %v1952
    %v1954 = vpop.f32.mrb[0].mxu0
    %v1955 = vpop.f32.mrb[0].mxu0
    %v1956 = vadd.f32 %v1915, %v1955
    %v1957 = vpop.f32.mrb[0].mxu0
    %1958 = vdwg.mxu0
    %v1959 = vmul.f32 %v1697, 0.5
    %v1960 = vmul.f32 %v1699, 0.5
    %v1961 = vmul.f32 %v1783, 0.5
    %v1962 = vmul.f32 %v1785, 0.5
    %v1963 = vmul.f32 %v1869, 0.5
    %v1964 = vmul.f32 %v1871, 0.5
    %v1965 = vmul.f32 %v1953, 0.5
    %v1966 = vmul.f32 %v1701, 0.5
    %v1967 = vmul.f32 %v1703, 0.5
    %v1968 = vmul.f32 %v1787, 0.5
    %v1969 = vmul.f32 %v1789, 0.5
    %v1970 = vmul.f32 %v1873, 0.5
    %v1971 = vmul.f32 %v1875, 0.5
    %v1972 = vmul.f32 %v1956, 0.5
    %v1973 = vtanh.pop %v1959
    %v1974 = vtanh.pop %v1960
    %v1975 = vtanh.pop %v1961
    %v1976 = vtanh.pop %v1962
    %v1977 = vtanh.pop %v1963
    %v1978 = vtanh.pop %v1964
    %v1979 = vtanh.pop %v1965
    %v1980 = vtanh.pop %v1966
    %v1981 = vtanh.pop %v1967
    %v1982 = vtanh.pop %v1968
    %v1983 = vtanh.pop %v1969
    %v1984 = vtanh.pop %v1970
    %v1985 = vtanh.pop %v1971
    %v1986 = vtanh.pop %v1972
    %v1987 = vadd.f32 %v1973, 1.0
    %v1988 = vadd.f32 %v1974, 1.0
    %v1989 = vadd.f32 %v1975, 1.0
    %v1990 = vadd.f32 %v1976, 1.0
    %v1991 = vadd.f32 %v1977, 1.0
    %v1992 = vadd.f32 %v1978, 1.0
    %v1993 = vadd.f32 %v1979, 1.0
    %v1994 = vadd.f32 %v1980, 1.0
    %v1995 = vadd.f32 %v1981, 1.0
    %v1996 = vadd.f32 %v1982, 1.0
    %v1997 = vadd.f32 %v1983, 1.0
    %v1998 = vadd.f32 %v1984, 1.0
    %v1999 = vadd.f32 %v1985, 1.0
    %v2000 = vadd.f32 %v1986, 1.0
    %v2001 = vmul.f32 %v1987, 0.5
    %v2002 = vmul.f32 %v1988, 0.5
    %v2003 = vmul.f32 %v1989, 0.5
    %v2004 = vmul.f32 %v1990, 0.5
    %v2005 = vmul.f32 %v1991, 0.5
    %v2006 = vmul.f32 %v1992, 0.5
    %v2007 = vmul.f32 %v1993, 0.5
    %v2008 = vmul.f32 %v1994, 0.5
    %v2009 = vmul.f32 %v1995, 0.5
    %v2010 = vmul.f32 %v1996, 0.5
    %v2011 = vmul.f32 %v1997, 0.5
    %v2012 = vmul.f32 %v1998, 0.5
    %v2013 = vmul.f32 %v1999, 0.5
    %v2014 = vmul.f32 %v2000, 0.5
    %v2015 = vpack.c.bf16 %v2008, %v2001
    %v2016 = vpack.c.bf16 %v2009, %v2002
    %v2017 = vpack.c.bf16 %v2010, %v2003
    %v2018 = vpack.c.bf16 %v2011, %v2004
    %v2019 = vpack.c.bf16 %v2012, %v2005
    %v2020 = vpack.c.bf16 %v2013, %v2006
    %v2021 = vpack.c.bf16 %v2014, %v2007
    %v2029 = vunpack.c.l.b16 %v2015
    %v2030 = vunpack.c.l.b16 %v2016
    %v2031 = vunpack.c.l.b16 %v2017
    %v2032 = vunpack.c.l.b16 %v2018
    %v2033 = vunpack.c.l.b16 %v2019
    %v2034 = vunpack.c.l.b16 %v2020
    %v2035 = vunpack.c.l.b16 %v2021
    %v2036 = vunpack.c.h.b16 %v2015
    %v2037 = vunpack.c.h.b16 %v2016
    %v2038 = vunpack.c.h.b16 %v2017
    %v2039 = vunpack.c.h.b16 %v2018
    %v2040 = vunpack.c.h.b16 %v2019
    %v2041 = vunpack.c.h.b16 %v2020
    %v2042 = vunpack.c.h.b16 %v2021
    %v2043 = vpack.c.b16 %v2030, %v2029
    %v2044 = vpack.c.b16 %v2032, %v2031
    %v2045 = vpack.c.b16 %v2034, %v2033
    %v2046 = vpack.c.b16 %v2035, %v2035
    %v2047 = vpack.c.b16 %v2037, %v2036
    %v2048 = vpack.c.b16 %v2039, %v2038
    %v2049 = vpack.c.b16 %v2041, %v2040
    %v2050 = vpack.c.b16 %v2042, %v2042
    %2059 = vst [vmem:[#allocation2] sm:$0xff] %v2043
    %2060 = vst [vmem:[#allocation2 + $0x8] sm:$0xff] %v2044
    %2061 = vst [vmem:[#allocation2 + $0x10] sm:$0xff] %v2045
    %vm2062 = vcmask 125952
    %2063 = vst.msk [vmem:[#allocation2 + $0x18] sm:$0xf] %vm2062, %v2046
    %2064 = vst [vmem:[#allocation2 + $0x1c] sm:$0xff] %v2047
    %2065 = vst [vmem:[#allocation2 + $0x24] sm:$0xff] %v2048
    %2066 = vst [vmem:[#allocation2 + $0x2c] sm:$0xff] %v2049
    %2067 = vst.msk [vmem:[#allocation2 + $0x34] sm:$0xf] %vm2062, %v2050
    // Predicated region
    $region22: #{tpu_custom_call.1} parent=1 // pred_check
      _
    $region23: #{tpu_custom_call.1} parent=1 // pred_check_branch
      %2069 = sbr.rel (0) target = $region25
    $region24: #{tpu_custom_call.1} parent=1 // pred_region
      %s2071 = ssub.s32 896, 896
      %2072 = vsyncadd [#allocation3], %s2071
      %s2073 = sshll.u32 [#allocation2], 4
      %s2074 = int_to_ptr.vmem [resolvable:$true] %s2073
      %2079 = dma.vmem_to_hbm [thread:$0]  %s2074, 896, %s5, [#allocation3], 448, 448, 28
    $region25: #{tpu_custom_call.1} parent=1 // pred_fallthru
      _
    // Predicated region
    $region26: #{tpu_custom_call.1} parent=1 // pred_check
      _
    $region27: #{tpu_custom_call.1} parent=1 // pred_check_branch
      %2081 = sbr.rel (0) target = $region29
    $region28: #{tpu_custom_call.1} parent=1 // pred_region
      %2082 = dma.done [#allocation3], 896
    $region29: #{tpu_custom_call.1} parent=1 // pred_fallthru
      _
    %2083 = vsyncpa [#allocation3], 1

</llo_original>
